<compile_context>
chip_gen: v6e
topology: v6e:2x2x1
jax: 0.10.0
libtpu: 0.0.40
codegen_flags: <defaults>
</compile_context>

<pallas_src>
import functools

import jax
import jax.numpy as jnp
from jax.experimental import pallas as pl
from jax.experimental.pallas import tpu as pltpu


def _round_up(v, m):
    return (v + m - 1) // m * m


def _num_tensorcores_per_chip():
    """Best-effort detection: v7x has 2 TensorCores per chip, v5e/v6e have 1."""
    try:
        kind = jax.devices()[0].device_kind.lower()
        if "v7" in kind or "7x" in kind:
            return 2
    except Exception:
        pass
    return 1


# ----------------------------------------------------------------------------
# Kernel 1: per-batch pairwise squared distances, exact formulation (VPU only)
#   d[b, i, j] = sum_c (pos[b, i, c] - pos[b, j, c])^2
# ----------------------------------------------------------------------------
def _sqdist_kernel(pos_ref, posT_ref, out_ref):
    p = pos_ref[...]          # (bt, tq, 3)
    pt = posT_ref[...]        # (bt, 3, N)
    d = (p[:, :, 0:1] - pt[:, 0:1, :]) ** 2
    d = d + (p[:, :, 1:2] - pt[:, 1:2, :]) ** 2
    d = d + (p[:, :, 2:3] - pt[:, 2:3, :]) ** 2
    out_ref[...] = d


def pairwise_sqdist(pos, tq=512):
    bz, N, _ = pos.shape
    posT = jnp.swapaxes(pos, 1, 2)                      # (bz, 3, N), cheap in HBM
    tq = min(tq, N)
    # pack several batches per grid step; target ~4 MiB of lane-dense output per
    # step (HBM-writeback bound kernel, amortizes ~0.35us/step pipeline overhead)
    bt = min(bz, max(1, (4 << 20) // max(1, tq * N * 4)))
    while bz % bt:
        bt -= 1
    grid = (bz // bt, pl.cdiv(N, tq))
    return pl.pallas_call(
        _sqdist_kernel,
        out_shape=jax.ShapeDtypeStruct((bz, N, N), jnp.float32),
        grid=grid,
        in_specs=[pl.BlockSpec((bt, tq, 3), lambda b, i: (b, i, 0)),
                  pl.BlockSpec((bt, 3, N), lambda b, i: (b, 0, 0))],
        out_specs=pl.BlockSpec((bt, tq, N), lambda b, i: (b, i, 0)),
        compiler_params=pltpu.CompilerParams(
            dimension_semantics=("parallel", "parallel"),
            vmem_limit_bytes=32 * 1024 * 1024),
        cost_estimate=pl.CostEstimate(
            flops=int(8 * bz * N * N), transcendentals=0,
            bytes_accessed=int(4 * bz * N * (N + 6))),
    )(pos, posT)


# ----------------------------------------------------------------------------
# Kernel 2: fused relation-MLP + modulation + max-over-k + feat-MLP
# Single lane-packed input row:
#   [ gx (CX*K) | gp_feat (3K) | center (3) | gathered_pos (3K) | eucl (K) ]
# Relation-vector construction folded into the (stacked / block-diagonal)
# weights; bf16 matmul operands, f32 accumulation; elementwise math in f32.
# ----------------------------------------------------------------------------
def _relation_kernel(packed_ref, w_ref, out_ref, *, K, CX, seg):
    f32, bf16 = jnp.float32, jnp.bfloat16

    def W(name):                       # static slice of the packed weight slab
        r0, (rr, cc) = seg[name]
        return w_ref[r0:r0 + rr, :cc]

    packed = packed_ref[...]           # (tm, CX*K + 7K + 3), bf16
    xw, pw = K * CX, 3 * K
    gx = packed[:, :xw]                # gathered_x, k packed in lanes
    gp_feat = packed[:, xw:xw + pw]    # gathered_pos used as features
    rel = packed[:, xw + pw:]          # [center | gathered_pos | eucl]

    # Layer 1 of relation_vec_to_weights_net with the relation vector
    #   rel_k = [center, g_k, g_k - center, |g_k - center|]
    # folded into ONE stacked matmul:
    #   rel @ [Wc-Wr ; kron(Wg+Wr) ; kron(We)]
    h = jnp.dot(rel, W("w1"), preferred_element_type=f32)
    h = jnp.maximum(h + W("b1").astype(f32), 0.0)                      # (tm, 32K)

    # Layers 2-3 as block-diagonal (per-k) matmuls, MXU-friendly widths.
    h = jnp.dot(h.astype(bf16), W("w2"), preferred_element_type=f32)
    h = jnp.maximum(h + W("b2").astype(f32), 0.0)
    cw = jnp.dot(h.astype(bf16), W("w3"), preferred_element_type=f32)
    cw = cw + W("b3").astype(f32)                                      # (tm, Cin*K)

    # conv_weights * gathered_feat (f32), then max over the k neighbors (tree).
    prod_x = cw[:, :xw] * gx.astype(f32)                               # (tm, CX*K)
    prod_p = cw[:, xw:] * gp_feat.astype(f32)                          # (tm, 3K)

    def tree_max(p, width):            # balanced binary tree over the k groups
        parts = [p[:, kk * width:(kk + 1) * width] for kk in range(K)]
        while len(parts) > 1:
            nxt = [jnp.maximum(parts[i], parts[i + 1])
                   for i in range(0, len(parts) - 1, 2)]
            if len(parts) % 2:
                nxt.append(parts[-1])
            parts = nxt
        return parts[0]

    mx = jnp.maximum(tree_max(prod_x, CX), 0.0)                        # (tm, CX)
    mp = jnp.maximum(tree_max(prod_p, 3), 0.0)                         # (tm, 3)

    # feat_mlp_net (BN folded); w4 split into x / pos blocks -> no concat.
    h1 = jnp.dot(mx.astype(bf16), W("w4x"), preferred_element_type=f32)
    h1 = h1 + jnp.dot(mp.astype(bf16), W("w4p"), preferred_element_type=f32)
    h1 = jnp.maximum(h1 + W("b4").astype(f32), 0.0)
    out = jnp.dot(h1.astype(bf16), W("w5"), preferred_element_type=f32)
    out = out + W("b5").astype(f32)
    out_ref[...] = out.astype(out_ref.dtype)


def pack_relation_weights(params, K, CX, cout_pad, dtype=jnp.bfloat16):
    """Transform the per-layer weights into one lane/sublane-aligned bf16 slab.

    Call ONCE at parameter-init time (hoisted out of the forward)."""
    w1, b1 = params["w1"], params["b1"]      # (10, 32), (32,)
    w2, b2 = params["w2"], params["b2"]      # (32, Cin), (Cin,)
    w3, b3 = params["w3"], params["b3"]      # (Cin, Cin), (Cin,)
    w4, b4 = params["w4"], params["b4"]      # (Cin, Cout), (Cout,)   BN folded
    w5, b5 = params["w5"], params["b5"]      # (Cout, Cout), (Cout,)  BN folded
    cin, cout = w2.shape[1], w5.shape[1]
    assert cin == CX + 3

    eye = jnp.eye(K, dtype=jnp.float32)
    kron = lambda m: jnp.kron(eye, m.astype(jnp.float32))

    Wc, Wg, Wr, We = w1[0:3], w1[3:6], w1[6:9], w1[9:10]
    # Single stacked layer-1 weight; row order matches the packed-input tail
    # [center (3) | gathered_pos (3K) | eucl (K)].
    w1_stacked = jnp.concatenate(
        [jnp.tile(Wc - Wr, (1, K)), kron(Wg + Wr), kron(We)], axis=0)  # (3+4K, 32K)

    # permute w3's output columns so conv_weights line up with the packed
    # feature layout [x-channels grouped by k | pos-channels grouped by k]
    perm = ([kk * cin + c for kk in range(K) for c in range(CX)] +
            [kk * cin + CX + c for kk in range(K) for c in range(3)])
    perm = jnp.asarray(perm, dtype=jnp.int32)

    mats = {
        "w1": w1_stacked,
        "b1": jnp.tile(b1, K)[None, :],
        "w2": kron(w2),
        "b2": jnp.tile(b2, K)[None, :],
        "w3": kron(w3)[:, perm],
        "b3": jnp.tile(b3, K)[perm][None, :],
        "w4x": jnp.zeros((CX, cout_pad), jnp.float32).at[:, :cout].set(w4[:CX]),
        "w4p": jnp.zeros((3, cout_pad), jnp.float32).at[:, :cout].set(w4[CX:]),
        "b4": jnp.zeros((1, cout_pad), jnp.float32).at[0, :cout].set(b4),
        "w5": jnp.zeros((cout_pad, cout_pad), jnp.float32).at[:cout, :cout].set(w5),
        "b5": jnp.zeros((1, cout_pad), jnp.float32).at[0, :cout].set(b5),
    }

    width = _round_up(max(m.shape[1] for m in mats.values()), 128)
    seg, rows = {}, 0
    for name, m in mats.items():
        seg[name] = (rows, tuple(m.shape))
        rows += _round_up(m.shape[0], 16)      # 16-row aligned (bf16 sublane pack)
    slab = jnp.zeros((_round_up(rows, 16), width), jnp.float32)
    for name, m in mats.items():
        r0, _ = seg[name]
        slab = slab.at[r0:r0 + m.shape[0], :m.shape[1]].set(m)
    return slab.astype(dtype), seg


def _choose_tm(R, tm_cap=1024, min_steps=1):
    """Row tile: single large tile on 1-TC chips, >= min_steps tiles on v7x."""
    if R <= 8:
        return 8
    n_tiles = max(min_steps, pl.cdiv(R, tm_cap))
    tm = pl.cdiv(R, n_tiles)
    return _round_up(tm, 128) if tm >= 128 else _round_up(tm, 8)


def _fused_relation_mlp(packed, slab, seg, *, K, CX, cout_pad, tm):
    R, Wp = packed.shape
    assert R % tm == 0                              # caller pads rows to the tile
    cin = CX + 3
    # dense MXU work actually issued per row (block-diagonal layout)
    flops_row = 2 * ((3 + 4 * K) * 32 * K + 32 * K * cin * K +
                     cin * K * cin * K + cin * cout_pad + cout_pad * cout_pad)
    bytes_acc = (R * Wp * 2 + R * cout_pad * 4 +
                 int(slab.size) * slab.dtype.itemsize)
    kernel = functools.partial(_relation_kernel, K=K, CX=CX, seg=seg)
    return pl.pallas_call(
        kernel,
        out_shape=jax.ShapeDtypeStruct((R, cout_pad), jnp.float32),
        grid=(R // tm,),
        in_specs=[pl.BlockSpec((tm, Wp), lambda i: (i, 0)),
                  pl.BlockSpec(slab.shape, lambda i: (0, 0))],
        out_specs=pl.BlockSpec((tm, cout_pad), lambda i: (i, 0)),
        compiler_params=pltpu.CompilerParams(
            dimension_semantics=("parallel",),
            vmem_limit_bytes=32 * 1024 * 1024),
        cost_estimate=pl.CostEstimate(
            flops=int(flops_row) * int(R), transcendentals=0,
            bytes_accessed=int(bytes_acc)),
    )(packed, slab)


# ----------------------------------------------------------------------------
# Parameter construction (deterministic, synthetic). feat_mlp_net BatchNorm is
# folded in inference mode into the 1x1 conv weights.
# ----------------------------------------------------------------------------
def init_params(key, in_feat_dim, out_feat_dim, eps=1e-5):
    ks = jax.random.split(key, 20)
    w = lambda k, s, sc=0.3: (sc * jax.random.normal(k, s)).astype(jnp.float32)

    p = {}
    # relation_vec_to_weights_net (bn=False, last_act=False): 10 -> 32 -> Cin -> Cin
    p["w1"], p["b1"] = w(ks[0], (10, 32)), w(ks[1], (32,), 0.1)
    p["w2"], p["b2"] = w(ks[2], (32, in_feat_dim)), w(ks[3], (in_feat_dim,), 0.1)
    p["w3"], p["b3"] = w(ks[4], (in_feat_dim, in_feat_dim)), w(ks[5], (in_feat_dim,), 0.1)

    # feat_mlp_net (bn=True, last_act=False): Cin -> Cout -> Cout
    def fold_bn(kk, wm, bv, c):
        k1, k2, k3, k4 = jax.random.split(kk, 4)
        gamma = 1.0 + 0.1 * jax.random.normal(k1, (c,))
        beta = 0.1 * jax.random.normal(k2, (c,))
        mean = 0.1 * jax.random.normal(k3, (c,))
        var = 1.0 + 0.1 * jnp.abs(jax.random.normal(k4, (c,)))
        scale = gamma / jnp.sqrt(var + eps)
        return (wm * scale[None, :]).astype(jnp.float32), \
               ((bv - mean) * scale + beta).astype(jnp.float32)

    w4, b4 = w(ks[6], (in_feat_dim, out_feat_dim)), w(ks[7], (out_feat_dim,), 0.1)
    w5, b5 = w(ks[8], (out_feat_dim, out_feat_dim)), w(ks[9], (out_feat_dim,), 0.1)
    p["w4"], p["b4"] = fold_bn(ks[10], w4, b4, out_feat_dim)
    p["w5"], p["b5"] = fold_bn(ks[11], w5, b5, out_feat_dim)
    return p


# ----------------------------------------------------------------------------
# Full forward (sampled_idx=None path: sampled points == all points)
# ----------------------------------------------------------------------------
def relation_conv_forward(x, pos, slab, seg, k, cout, relative_pos=False,
                          tm_cap=1024, min_grid_steps=None):
    bz, N, CX = x.shape
    cout_pad = _round_up(cout, 128)
    R = bz * N
    if min_grid_steps is None:
        min_grid_steps = _num_tensorcores_per_chip()

    dist = pairwise_sqdist(pos)                                   # (bz, N, N), exact
    neg_d, nn_idx = jax.lax.top_k(-dist, k)                       # k smallest dists
    eucl = jnp.sqrt(jnp.maximum(-neg_d, 0.0))                     # (bz, N, k)

    # TODO(synk): fuse this gather into the kernel via scalar-prefetch DMA gathers.
    gather = jax.vmap(lambda v, i: v[i])                          # batched_index_select
    gathered_pos = gather(pos, nn_idx)                            # (bz, N, k, 3)
    gathered_x = gather(x, nn_idx)                                # (bz, N, k, CX)

    center = pos.reshape(R, 3)
    gp = gathered_pos.reshape(R, k * 3)
    gx = gathered_x.reshape(R, k * CX)
    eu = eucl.reshape(R, k)
    if relative_pos:
        gp_feat = (gathered_pos - pos[:, :, None, :]).reshape(R, k * 3)
    else:
        gp_feat = gp

    # ONE lane-packed, bf16 input row per point (single lane-dense DMA per step);
    # relation_vec / gathered_feat are never materialized — folded weights.
    packed = jnp.concatenate([gx, gp_feat, center, gp, eu], axis=-1)
    packed = packed.astype(jnp.bfloat16)

    tm = _choose_tm(R, tm_cap, min_grid_steps)
    R_pad = pl.cdiv(R, tm) * tm
    if R_pad != R:
        packed = jnp.pad(packed, ((0, R_pad - R), (0, 0)))
    out = _fused_relation_mlp(packed, slab, seg, K=k, CX=CX,
                              cout_pad=cout_pad, tm=tm)
    return out[:R, :cout].reshape(bz, N, cout)


# ----------------------------------------------------------------------------
# References for correctness checks
# ----------------------------------------------------------------------------
def _folded_reference(packed, slab, seg, K, CX):
    """Plain-JAX mirror of the kernel math (same bf16 operands / f32 accum)."""
    f32, bf16 = jnp.float32, jnp.bfloat16

    def W(name):
        r0, (rr, cc) = seg[name]
        return slab[r0:r0 + rr, :cc]

    xw, pw = K * CX, 3 * K
    gx, gpf, rel = packed[:, :xw], packed[:, xw:xw + pw], packed[:, xw + pw:]
    h = jnp.dot(rel, W("w1"), preferred_element_type=f32)
    h = jnp.maximum(h + W("b1").astype(f32), 0.0)
    h = jnp.dot(h.astype(bf16), W("w2"), preferred_element_type=f32)
    h = jnp.maximum(h + W("b2").astype(f32), 0.0)
    cw = jnp.dot(h.astype(bf16), W("w3"), preferred_element_type=f32) + W("b3").astype(f32)
    prod_x = cw[:, :xw] * gx.astype(f32)
    prod_p = cw[:, xw:] * gpf.astype(f32)
    mx = jnp.maximum(jnp.max(prod_x.reshape(-1, K, CX), axis=1), 0.0)
    mp = jnp.maximum(jnp.max(prod_p.reshape(-1, K, 3), axis=1), 0.0)
    h1 = (jnp.dot(mx.astype(bf16), W("w4x"), preferred_element_type=f32) +
          jnp.dot(mp.astype(bf16), W("w4p"), preferred_element_type=f32))
    h1 = jnp.maximum(h1 + W("b4").astype(f32), 0.0)
    return jnp.dot(h1.astype(bf16), W("w5"), preferred_element_type=f32) + W("b5").astype(f32)


def _mlp_reference(rel, gf, p):
    """Original (unfolded, f32) math of the PyTorch module."""
    R, K, RC = rel.shape
    Cin = gf.shape[-1]
    r = rel.reshape(R * K, RC)
    h = jnp.maximum(r @ p["w1"] + p["b1"], 0.0)
    h = jnp.maximum(h @ p["w2"] + p["b2"], 0.0)
    cw = h @ p["w3"] + p["b3"]
    prod = (cw * gf.reshape(R * K, Cin)).reshape(R, K, Cin)
    m = jnp.maximum(jnp.max(prod, axis=1), 0.0)
    h1 = jnp.maximum(m @ p["w4"] + p["b4"], 0.0)
    return h1 @ p["w5"] + p["b5"]


if __name__ == "__main__":
    bz, N, k = 2, 64, 8
    in_feat_dim, out_feat_dim = 16, 32           # x has in_feat_dim - 3 = 13 channels
    feat_dim = in_feat_dim - 3

    key = jax.random.PRNGKey(0)
    kx, kp, kw = jax.random.split(key, 3)
    x = jax.random.normal(kx, (bz, N, feat_dim), dtype=jnp.float32)
    pos = jax.random.normal(kp, (bz, N, 3), dtype=jnp.float32)
    params = init_params(kw, in_feat_dim, out_feat_dim)

    # Weight packing hoisted out of the forward: runs once per parameter set.
    cout_pad = _round_up(out_feat_dim, 128)
    slab, seg = pack_relation_weights(params, k, feat_dim, cout_pad)

    fwd = jax.jit(lambda x_, pos_, slab_: relation_conv_forward(
        x_, pos_, slab_, seg, k=k, cout=out_feat_dim))
    out = jax.block_until_ready(fwd(x, pos, slab))
    assert out.shape == (bz, N, out_feat_dim)

    # --- check 1: distance kernel vs plain JAX -------------------------------
    dist_ref = jnp.sum((pos[:, :, None, :] - pos[:, None, :, :]) ** 2, axis=-1)
    dist_krn = pairwise_sqdist(pos)
    assert jnp.allclose(dist_krn, dist_ref, atol=1e-3, rtol=1e-3)

    # --- check 2 (tight): kernel vs same-precision folded reference ----------
    neg_d, nn_idx = jax.lax.top_k(-dist_krn, k)
    eucl = jnp.sqrt(jnp.maximum(-neg_d, 0.0))
    gather = jax.vmap(lambda v, i: v[i])
    gpos, gxv = gather(pos, nn_idx), gather(x, nn_idx)
    R = bz * N
    packed = jnp.concatenate(
        [gxv.reshape(R, k * feat_dim), gpos.reshape(R, k * 3),
         pos.reshape(R, 3), gpos.reshape(R, k * 3), eucl.reshape(R, k)],
        axis=-1).astype(jnp.bfloat16)
    ref_tight = _folded_reference(packed, slab, seg, k, feat_dim)
    ref_tight = ref_tight[:, :out_feat_dim].reshape(bz, N, out_feat_dim)
    assert jnp.allclose(out, ref_tight, atol=2e-3, rtol=2e-3)

    # --- check 3 (loose): kernel vs original unfolded f32 semantics ----------
    center = pos[:, :, None, :]
    rvec = gpos - center
    eucl_n = jnp.linalg.norm(rvec, axis=-1, keepdims=True)
    relation_vec = jnp.concatenate(
        [jnp.broadcast_to(center, gpos.shape), gpos, rvec, eucl_n], axis=-1)
    gfeat = jnp.concatenate([gxv, gpos], axis=-1)
    ref = _mlp_reference(relation_vec.reshape(R, k, 10),
                         gfeat.reshape(R, k, in_feat_dim),
                         params).reshape(bz, N, out_feat_dim)
    rel_err = jnp.max(jnp.abs(out - ref)) / (jnp.max(jnp.abs(ref)) + 1e-6)
    assert float(rel_err) < 5e-2          # bf16 matmul operands, f32 accumulate

    print("KERNEL_OK")
</pallas_src>

<mosaic_0001>
module attributes {stable_mosaic.version = 11 : i64} {
  func.func @_sqdist_kernel(%arg0: i32, %arg1: i32, %arg2: memref<2x64x3xf32, #tpu.memory_space<vmem>>, %arg3: memref<2x3x64xf32, #tpu.memory_space<vmem>>, %arg4: memref<2x64x64xf32, #tpu.memory_space<vmem>>) attributes {dimension_semantics = [#tpu.dimension_semantics<parallel>, #tpu.dimension_semantics<parallel>], iteration_bounds = array<i64: 1, 1>, scalar_prefetch = 0 : i64, scratch_operands = 0 : i64, tpu.core_type = #tpu.core_type<tc>, window_params = [{transform_indices = @transform_0, window_bounds = array<i64: 2, 64, 3>}, {transform_indices = @transform_1, window_bounds = array<i64: 2, 3, 64>}, {transform_indices = @transform_2, window_bounds = array<i64: 2, 64, 64>}]} {
    %c0 = arith.constant 0 : index
    %c0_0 = arith.constant 0 : index
    %c0_1 = arith.constant 0 : index
    %0 = vector.load %arg2[%c0, %c0_0, %c0_1] : memref<2x64x3xf32, #tpu.memory_space<vmem>>, vector<2x64x3xf32>
    %c0_2 = arith.constant 0 : index
    %c0_3 = arith.constant 0 : index
    %c0_4 = arith.constant 0 : index
    %1 = vector.load %arg3[%c0_2, %c0_3, %c0_4] : memref<2x3x64xf32, #tpu.memory_space<vmem>>, vector<2x3x64xf32>
    %2 = vector.extract_strided_slice %0 {offsets = [0, 0, 0], sizes = [2, 64, 1], strides = [1, 1, 1]} : vector<2x64x3xf32> to vector<2x64x1xf32>
    %3 = vector.extract_strided_slice %1 {offsets = [0, 0, 0], sizes = [2, 1, 64], strides = [1, 1, 1]} : vector<2x3x64xf32> to vector<2x1x64xf32>
    %4 = vector.broadcast %2 : vector<2x64x1xf32> to vector<2x64x64xf32>
    %5 = vector.broadcast %3 : vector<2x1x64xf32> to vector<2x64x64xf32>
    %6 = arith.subf %4, %5 : vector<2x64x64xf32>
    %7 = arith.mulf %6, %6 : vector<2x64x64xf32>
    %8 = vector.extract_strided_slice %0 {offsets = [0, 0, 1], sizes = [2, 64, 1], strides = [1, 1, 1]} : vector<2x64x3xf32> to vector<2x64x1xf32>
    %9 = vector.extract_strided_slice %1 {offsets = [0, 1, 0], sizes = [2, 1, 64], strides = [1, 1, 1]} : vector<2x3x64xf32> to vector<2x1x64xf32>
    %10 = vector.broadcast %8 : vector<2x64x1xf32> to vector<2x64x64xf32>
    %11 = vector.broadcast %9 : vector<2x1x64xf32> to vector<2x64x64xf32>
    %12 = arith.subf %10, %11 : vector<2x64x64xf32>
    %13 = arith.mulf %12, %12 : vector<2x64x64xf32>
    %14 = arith.addf %7, %13 : vector<2x64x64xf32>
    %15 = vector.extract_strided_slice %0 {offsets = [0, 0, 2], sizes = [2, 64, 1], strides = [1, 1, 1]} : vector<2x64x3xf32> to vector<2x64x1xf32>
    %16 = vector.extract_strided_slice %1 {offsets = [0, 2, 0], sizes = [2, 1, 64], strides = [1, 1, 1]} : vector<2x3x64xf32> to vector<2x1x64xf32>
    %17 = vector.broadcast %15 : vector<2x64x1xf32> to vector<2x64x64xf32>
    %18 = vector.broadcast %16 : vector<2x1x64xf32> to vector<2x64x64xf32>
    %19 = arith.subf %17, %18 : vector<2x64x64xf32>
    %20 = arith.mulf %19, %19 : vector<2x64x64xf32>
    %21 = arith.addf %14, %20 : vector<2x64x64xf32>
    %c0_5 = arith.constant 0 : index
    %c0_6 = arith.constant 0 : index
    %c0_7 = arith.constant 0 : index
    %22 = vector.load %arg4[%c0_5, %c0_6, %c0_7] : memref<2x64x64xf32, #tpu.memory_space<vmem>>, vector<2x64x64xf32>
    tpu.vector_store %arg4[%c0_5, %c0_6, %c0_7], %21 {strides = array<i32>} : memref<2x64x64xf32, #tpu.memory_space<vmem>>, vector<2x64x64xf32>,
    return
  }
  func.func @transform_0(%arg0: i32, %arg1: i32) -> (i32, i32, i32) {
    %c0_i32 = arith.constant 0 : i32
    %c0_i32_0 = arith.constant 0 : i32
    return %arg0, %arg1, %c0_i32 : i32, i32, i32
  }
  func.func @transform_1(%arg0: i32, %arg1: i32) -> (i32, i32, i32) {
    %c0_i32 = arith.constant 0 : i32
    %c0_i32_0 = arith.constant 0 : i32
    %c0_i32_1 = arith.constant 0 : i32
    return %arg0, %c0_i32, %c0_i32_0 : i32, i32, i32
  }
  func.func @transform_2(%arg0: i32, %arg1: i32) -> (i32, i32, i32) {
    %c0_i32 = arith.constant 0 : i32
    %c0_i32_0 = arith.constant 0 : i32
    return %arg0, %arg1, %c0_i32 : i32, i32, i32
  }
}

module attributes {stable_mosaic.version = 11 : i64} {
  func.func @_relation_kernel(%arg0: i32, %arg1: memref<128x163xbf16, #tpu.memory_space<vmem>>, %arg2: memref<672x256xbf16, #tpu.memory_space<vmem>>, %arg3: memref<128x128xf32, #tpu.memory_space<vmem>>) attributes {dimension_semantics = [#tpu.dimension_semantics<parallel>], iteration_bounds = array<i64: 1>, scalar_prefetch = 0 : i64, scratch_operands = 0 : i64, tpu.core_type = #tpu.core_type<tc>, window_params = [{transform_indices = @transform_0, window_bounds = array<i64: 128, 163>}, {pipeline_mode = #tpu.pipeline_mode<synchronous>, transform_indices = @transform_1, window_bounds = array<i64: 672, 256>}, {transform_indices = @transform_2, window_bounds = array<i64: 128, 128>}]} {
    %c0 = arith.constant 0 : index
    %c0_0 = arith.constant 0 : index
    %0 = vector.load %arg1[%c0, %c0_0] : memref<128x163xbf16, #tpu.memory_space<vmem>>, vector<128x163xbf16>
    %1 = vector.extract_strided_slice %0 {offsets = [0, 0], sizes = [128, 104], strides = [1, 1]} : vector<128x163xbf16> to vector<128x104xbf16>
    %2 = vector.extract_strided_slice %0 {offsets = [0, 104], sizes = [128, 24], strides = [1, 1]} : vector<128x163xbf16> to vector<128x24xbf16>
    %3 = vector.extract_strided_slice %0 {offsets = [0, 128], sizes = [128, 35], strides = [1, 1]} : vector<128x163xbf16> to vector<128x35xbf16>
    %c0_1 = arith.constant 0 : index
    %c0_2 = arith.constant 0 : index
    %4 = vector.load %arg2[%c0_1, %c0_2] : memref<672x256xbf16, #tpu.memory_space<vmem>>, vector<35x256xbf16>
    %cst = arith.constant dense<0.000000e+00> : vector<128x256xf32>
    %5 = tpu.matmul %3, %4, %cst {dimension_numbers = #tpu.dot_dimension_numbers<[1], [0], [0], [1], [0, 0, 1, 1], [], []>} : vector<128x35xbf16>, vector<35x256xbf16>, vector<128x256xf32> -> vector<128x256xf32>
    %c48 = arith.constant 48 : index
    %c0_3 = arith.constant 0 : index
    %6 = vector.load %arg2[%c48, %c0_3] : memref<672x256xbf16, #tpu.memory_space<vmem>>, vector<1x256xbf16>
    %7 = arith.extf %6 : vector<1x256xbf16> to vector<1x256xf32>
    %8 = vector.broadcast %7 : vector<1x256xf32> to vector<128x256xf32>
    %9 = arith.addf %5, %8 : vector<128x256xf32>
    %cst_4 = arith.constant 0.000000e+00 : f32
    %10 = vector.broadcast %cst_4 : f32 to vector<128x256xf32>
    %11 = arith.maximumf %9, %10 : vector<128x256xf32>
    %12 = arith.truncf %11 : vector<128x256xf32> to vector<128x256xbf16>
    %c64 = arith.constant 64 : index
    %c0_5 = arith.constant 0 : index
    %13 = vector.load %arg2[%c64, %c0_5] : memref<672x256xbf16, #tpu.memory_space<vmem>>, vector<256x128xbf16>
    %cst_6 = arith.constant dense<0.000000e+00> : vector<128x128xf32>
    %14 = tpu.matmul %12, %13, %cst_6 {dimension_numbers = #tpu.dot_dimension_numbers<[1], [0], [0], [1], [0, 0, 1, 1], [], []>} : vector<128x256xbf16>, vector<256x128xbf16>, vector<128x128xf32> -> vector<128x128xf32>
    %c320 = arith.constant 320 : index
    %c0_7 = arith.constant 0 : index
    %15 = vector.load %arg2[%c320, %c0_7] : memref<672x256xbf16, #tpu.memory_space<vmem>>, vector<1x128xbf16>
    %16 = arith.extf %15 : vector<1x128xbf16> to vector<1x128xf32>
    %17 = vector.broadcast %16 : vector<1x128xf32> to vector<128x128xf32>
    %18 = arith.addf %14, %17 : vector<128x128xf32>
    %cst_8 = arith.constant 0.000000e+00 : f32
    %19 = vector.broadcast %cst_8 : f32 to vector<128x128xf32>
    %20 = arith.maximumf %18, %19 : vector<128x128xf32>
    %21 = arith.truncf %20 : vector<128x128xf32> to vector<128x128xbf16>
    %c336 = arith.constant 336 : index
    %c0_9 = arith.constant 0 : index
    %22 = vector.load %arg2[%c336, %c0_9] : memref<672x256xbf16, #tpu.memory_space<vmem>>, vector<128x128xbf16>
    %cst_10 = arith.constant dense<0.000000e+00> : vector<128x128xf32>
    %23 = tpu.matmul %21, %22, %cst_10 {dimension_numbers = #tpu.dot_dimension_numbers<[1], [0], [0], [1], [0, 0, 1, 1], [], []>} : vector<128x128xbf16>, vector<128x128xbf16>, vector<128x128xf32> -> vector<128x128xf32>
    %c464 = arith.constant 464 : index
    %c0_11 = arith.constant 0 : index
    %24 = vector.load %arg2[%c464, %c0_11] : memref<672x256xbf16, #tpu.memory_space<vmem>>, vector<1x128xbf16>
    %25 = arith.extf %24 : vector<1x128xbf16> to vector<1x128xf32>
    %26 = vector.broadcast %25 : vector<1x128xf32> to vector<128x128xf32>
    %27 = arith.addf %23, %26 : vector<128x128xf32>
    %28 = vector.extract_strided_slice %27 {offsets = [0, 0], sizes = [128, 104], strides = [1, 1]} : vector<128x128xf32> to vector<128x104xf32>
    %29 = arith.extf %1 : vector<128x104xbf16> to vector<128x104xf32>
    %30 = arith.mulf %28, %29 : vector<128x104xf32>
    %31 = vector.extract_strided_slice %27 {offsets = [0, 104], sizes = [128, 24], strides = [1, 1]} : vector<128x128xf32> to vector<128x24xf32>
    %32 = arith.extf %2 : vector<128x24xbf16> to vector<128x24xf32>
    %33 = arith.mulf %31, %32 : vector<128x24xf32>
    %34 = vector.extract_strided_slice %30 {offsets = [0, 0], sizes = [128, 13], strides = [1, 1]} : vector<128x104xf32> to vector<128x13xf32>
    %35 = vector.extract_strided_slice %30 {offsets = [0, 13], sizes = [128, 13], strides = [1, 1]} : vector<128x104xf32> to vector<128x13xf32>
    %36 = vector.extract_strided_slice %30 {offsets = [0, 26], sizes = [128, 13], strides = [1, 1]} : vector<128x104xf32> to vector<128x13xf32>
    %37 = vector.extract_strided_slice %30 {offsets = [0, 39], sizes = [128, 13], strides = [1, 1]} : vector<128x104xf32> to vector<128x13xf32>
    %38 = vector.extract_strided_slice %30 {offsets = [0, 52], sizes = [128, 13], strides = [1, 1]} : vector<128x104xf32> to vector<128x13xf32>
    %39 = vector.extract_strided_slice %30 {offsets = [0, 65], sizes = [128, 13], strides = [1, 1]} : vector<128x104xf32> to vector<128x13xf32>
    %40 = vector.extract_strided_slice %30 {offsets = [0, 78], sizes = [128, 13], strides = [1, 1]} : vector<128x104xf32> to vector<128x13xf32>
    %41 = vector.extract_strided_slice %30 {offsets = [0, 91], sizes = [128, 13], strides = [1, 1]} : vector<128x104xf32> to vector<128x13xf32>
    %42 = arith.maximumf %34, %35 : vector<128x13xf32>
    %43 = arith.maximumf %36, %37 : vector<128x13xf32>
    %44 = arith.maximumf %38, %39 : vector<128x13xf32>
    %45 = arith.maximumf %40, %41 : vector<128x13xf32>
    %46 = arith.maximumf %42, %43 : vector<128x13xf32>
    %47 = arith.maximumf %44, %45 : vector<128x13xf32>
    %48 = arith.maximumf %46, %47 : vector<128x13xf32>
    %cst_12 = arith.constant 0.000000e+00 : f32
    %49 = vector.broadcast %cst_12 : f32 to vector<128x13xf32>
    %50 = arith.maximumf %48, %49 : vector<128x13xf32>
    %51 = vector.extract_strided_slice %33 {offsets = [0, 0], sizes = [128, 3], strides = [1, 1]} : vector<128x24xf32> to vector<128x3xf32>
    %52 = vector.extract_strided_slice %33 {offsets = [0, 3], sizes = [128, 3], strides = [1, 1]} : vector<128x24xf32> to vector<128x3xf32>
    %53 = vector.extract_strided_slice %33 {offsets = [0, 6], sizes = [128, 3], strides = [1, 1]} : vector<128x24xf32> to vector<128x3xf32>
    %54 = vector.extract_strided_slice %33 {offsets = [0, 9], sizes = [128, 3], strides = [1, 1]} : vector<128x24xf32> to vector<128x3xf32>
    %55 = vector.extract_strided_slice %33 {offsets = [0, 12], sizes = [128, 3], strides = [1, 1]} : vector<128x24xf32> to vector<128x3xf32>
    %56 = vector.extract_strided_slice %33 {offsets = [0, 15], sizes = [128, 3], strides = [1, 1]} : vector<128x24xf32> to vector<128x3xf32>
    %57 = vector.extract_strided_slice %33 {offsets = [0, 18], sizes = [128, 3], strides = [1, 1]} : vector<128x24xf32> to vector<128x3xf32>
    %58 = vector.extract_strided_slice %33 {offsets = [0, 21], sizes = [128, 3], strides = [1, 1]} : vector<128x24xf32> to vector<128x3xf32>
    %59 = arith.maximumf %51, %52 : vector<128x3xf32>
    %60 = arith.maximumf %53, %54 : vector<128x3xf32>
    %61 = arith.maximumf %55, %56 : vector<128x3xf32>
    %62 = arith.maximumf %57, %58 : vector<128x3xf32>
    %63 = arith.maximumf %59, %60 : vector<128x3xf32>
    %64 = arith.maximumf %61, %62 : vector<128x3xf32>
    %65 = arith.maximumf %63, %64 : vector<128x3xf32>
    %cst_13 = arith.constant 0.000000e+00 : f32
    %66 = vector.broadcast %cst_13 : f32 to vector<128x3xf32>
    %67 = arith.maximumf %65, %66 : vector<128x3xf32>
    %68 = arith.truncf %50 : vector<128x13xf32> to vector<128x13xbf16>
    %c480 = arith.constant 480 : index
    %c0_14 = arith.constant 0 : index
    %69 = vector.load %arg2[%c480, %c0_14] : memref<672x256xbf16, #tpu.memory_space<vmem>>, vector<13x128xbf16>
    %cst_15 = arith.constant dense<0.000000e+00> : vector<128x128xf32>
    %70 = tpu.matmul %68, %69, %cst_15 {dimension_numbers = #tpu.dot_dimension_numbers<[1], [0], [0], [1], [0, 0, 1, 1], [], []>} : vector<128x13xbf16>, vector<13x128xbf16>, vector<128x128xf32> -> vector<128x128xf32>
    %71 = arith.truncf %67 : vector<128x3xf32> to vector<128x3xbf16>
    %c496 = arith.constant 496 : index
    %c0_16 = arith.constant 0 : index
    %72 = vector.load %arg2[%c496, %c0_16] : memref<672x256xbf16, #tpu.memory_space<vmem>>, vector<3x128xbf16>
    %cst_17 = arith.constant dense<0.000000e+00> : vector<128x128xf32>
    %73 = tpu.matmul %71, %72, %cst_17 {dimension_numbers = #tpu.dot_dimension_numbers<[1], [0], [0], [1], [0, 0, 1, 1], [], []>} : vector<128x3xbf16>, vector<3x128xbf16>, vector<128x128xf32> -> vector<128x128xf32>
    %74 = arith.addf %70, %73 : vector<128x128xf32>
    %c512 = arith.constant 512 : index
    %c0_18 = arith.constant 0 : index
    %75 = vector.load %arg2[%c512, %c0_18] : memref<672x256xbf16, #tpu.memory_space<vmem>>, vector<1x128xbf16>
    %76 = arith.extf %75 : vector<1x128xbf16> to vector<1x128xf32>
    %77 = vector.broadcast %76 : vector<1x128xf32> to vector<128x128xf32>
    %78 = arith.addf %74, %77 : vector<128x128xf32>
    %cst_19 = arith.constant 0.000000e+00 : f32
    %79 = vector.broadcast %cst_19 : f32 to vector<128x128xf32>
    %80 = arith.maximumf %78, %79 : vector<128x128xf32>
    %81 = arith.truncf %80 : vector<128x128xf32> to vector<128x128xbf16>
    %c528 = arith.constant 528 : index
    %c0_20 = arith.constant 0 : index
    %82 = vector.load %arg2[%c528, %c0_20] : memref<672x256xbf16, #tpu.memory_space<vmem>>, vector<128x128xbf16>
    %cst_21 = arith.constant dense<0.000000e+00> : vector<128x128xf32>
    %83 = tpu.matmul %81, %82, %cst_21 {dimension_numbers = #tpu.dot_dimension_numbers<[1], [0], [0], [1], [0, 0, 1, 1], [], []>} : vector<128x128xbf16>, vector<128x128xbf16>, vector<128x128xf32> -> vector<128x128xf32>
    %c656 = arith.constant 656 : index
    %c0_22 = arith.constant 0 : index
    %84 = vector.load %arg2[%c656, %c0_22] : memref<672x256xbf16, #tpu.memory_space<vmem>>, vector<1x128xbf16>
    %85 = arith.extf %84 : vector<1x128xbf16> to vector<1x128xf32>
    %86 = vector.broadcast %85 : vector<1x128xf32> to vector<128x128xf32>
    %87 = arith.addf %83, %86 : vector<128x128xf32>
    %c0_23 = arith.constant 0 : index
    %c0_24 = arith.constant 0 : index
    %88 = vector.load %arg3[%c0_23, %c0_24] : memref<128x128xf32, #tpu.memory_space<vmem>>, vector<128x128xf32>
    tpu.vector_store %arg3[%c0_23, %c0_24], %87 {strides = array<i32>} : memref<128x128xf32, #tpu.memory_space<vmem>>, vector<128x128xf32>,
    return
  }
  func.func @transform_0(%arg0: i32) -> (i32, i32) {
    %c0_i32 = arith.constant 0 : i32
    %c0_i32_0 = arith.constant 0 : i32
    return %arg0, %c0_i32 : i32, i32
  }
  func.func @transform_1(%arg0: i32) -> (i32, i32) {
    %c0_i32 = arith.constant 0 : i32
    %c0_i32_0 = arith.constant 0 : i32
    %c0_i32_1 = arith.constant 0 : i32
    return %c0_i32, %c0_i32_0 : i32, i32
  }
  func.func @transform_2(%arg0: i32) -> (i32, i32) {
    %c0_i32 = arith.constant 0 : i32
    %c0_i32_0 = arith.constant 0 : i32
    return %arg0, %c0_i32 : i32, i32
  }
}

</mosaic_0001>

<llo_original>
// kernel: neg.2
$region0: #{neg.2}
  #allocation0 [shape = 's32[1]{0}', space=sflag, size = 0x4, scoped, tag = 'scoped memory for neg.2']
  %s0 = inlined_call_operand.vmem [shape: f32[2,64,64], index: 0, kind: input, shape index: {}]
  %s1 = inlined_call_operand.vmem [shape: f32[2,64,64], index: 1, kind: output, shape index: {}]
  %v2 = vld [vmem:[%s0] sm:$0xff]
  %3 = xla_tuple %v2
  %4 = xla_tuple %3
  %v5 = vxor.u32 %v2, 2147483648
  %6 = xla_tuple %v5
  %7 = vst [vmem:[%s1] sm:$0xff] %v5
  %s8 = scalar_lea.vmem %s0, 64
  %v9 = vld [vmem:[%s8] sm:$0xff]
  %10 = xla_tuple %v9
  %11 = xla_tuple %10
  %v12 = vxor.u32 %v9, 2147483648
  %13 = xla_tuple %v12
  %s14 = scalar_lea.vmem %s1, 64
  %15 = vst [vmem:[%s14] sm:$0xff] %v12
  %s16 = scalar_lea.vmem %s0, 8
  %v17 = vld [vmem:[%s16] sm:$0xff]
  %18 = xla_tuple %v17
  %19 = xla_tuple %18
  %v20 = vxor.u32 %v17, 2147483648
  %21 = xla_tuple %v20
  %s22 = scalar_lea.vmem %s1, 8
  %23 = vst [vmem:[%s22] sm:$0xff] %v20
  %s24 = scalar_lea.vmem %s0, 72
  %v25 = vld [vmem:[%s24] sm:$0xff]
  %26 = xla_tuple %v25
  %27 = xla_tuple %26
  %v28 = vxor.u32 %v25, 2147483648
  %29 = xla_tuple %v28
  %s30 = scalar_lea.vmem %s1, 72
  %31 = vst [vmem:[%s30] sm:$0xff] %v28
  %s32 = scalar_lea.vmem %s0, 16
  %v33 = vld [vmem:[%s32] sm:$0xff]
  %34 = xla_tuple %v33
  %35 = xla_tuple %34
  %v36 = vxor.u32 %v33, 2147483648
  %37 = xla_tuple %v36
  %s38 = scalar_lea.vmem %s1, 16
  %39 = vst [vmem:[%s38] sm:$0xff] %v36
  %s40 = scalar_lea.vmem %s0, 80
  %v41 = vld [vmem:[%s40] sm:$0xff]
  %42 = xla_tuple %v41
  %43 = xla_tuple %42
  %v44 = vxor.u32 %v41, 2147483648
  %45 = xla_tuple %v44
  %s46 = scalar_lea.vmem %s1, 80
  %47 = vst [vmem:[%s46] sm:$0xff] %v44
  %s48 = scalar_lea.vmem %s0, 24
  %v49 = vld [vmem:[%s48] sm:$0xff]
  %50 = xla_tuple %v49
  %51 = xla_tuple %50
  %v52 = vxor.u32 %v49, 2147483648
  %53 = xla_tuple %v52
  %s54 = scalar_lea.vmem %s1, 24
  %55 = vst [vmem:[%s54] sm:$0xff] %v52
  %s56 = scalar_lea.vmem %s0, 88
  %v57 = vld [vmem:[%s56] sm:$0xff]
  %58 = xla_tuple %v57
  %59 = xla_tuple %58
  %v60 = vxor.u32 %v57, 2147483648
  %61 = xla_tuple %v60
  %s62 = scalar_lea.vmem %s1, 88
  %63 = vst [vmem:[%s62] sm:$0xff] %v60
  %s64 = scalar_lea.vmem %s0, 32
  %v65 = vld [vmem:[%s64] sm:$0xff]
  %66 = xla_tuple %v65
  %67 = xla_tuple %66
  %v68 = vxor.u32 %v65, 2147483648
  %69 = xla_tuple %v68
  %s70 = scalar_lea.vmem %s1, 32
  %71 = vst [vmem:[%s70] sm:$0xff] %v68
  %s72 = scalar_lea.vmem %s0, 96
  %v73 = vld [vmem:[%s72] sm:$0xff]
  %74 = xla_tuple %v73
  %75 = xla_tuple %74
  %v76 = vxor.u32 %v73, 2147483648
  %77 = xla_tuple %v76
  %s78 = scalar_lea.vmem %s1, 96
  %79 = vst [vmem:[%s78] sm:$0xff] %v76
  %s80 = scalar_lea.vmem %s0, 40
  %v81 = vld [vmem:[%s80] sm:$0xff]
  %82 = xla_tuple %v81
  %83 = xla_tuple %82
  %v84 = vxor.u32 %v81, 2147483648
  %85 = xla_tuple %v84
  %s86 = scalar_lea.vmem %s1, 40
  %87 = vst [vmem:[%s86] sm:$0xff] %v84
  %s88 = scalar_lea.vmem %s0, 104
  %v89 = vld [vmem:[%s88] sm:$0xff]
  %90 = xla_tuple %v89
  %91 = xla_tuple %90
  %v92 = vxor.u32 %v89, 2147483648
  %93 = xla_tuple %v92
  %s94 = scalar_lea.vmem %s1, 104
  %95 = vst [vmem:[%s94] sm:$0xff] %v92
  %s96 = scalar_lea.vmem %s0, 48
  %v97 = vld [vmem:[%s96] sm:$0xff]
  %98 = xla_tuple %v97
  %99 = xla_tuple %98
  %v100 = vxor.u32 %v97, 2147483648
  %101 = xla_tuple %v100
  %s102 = scalar_lea.vmem %s1, 48
  %103 = vst [vmem:[%s102] sm:$0xff] %v100
  %s104 = scalar_lea.vmem %s0, 112
  %v105 = vld [vmem:[%s104] sm:$0xff]
  %106 = xla_tuple %v105
  %107 = xla_tuple %106
  %v108 = vxor.u32 %v105, 2147483648
  %109 = xla_tuple %v108
  %s110 = scalar_lea.vmem %s1, 112
  %111 = vst [vmem:[%s110] sm:$0xff] %v108
  %s112 = scalar_lea.vmem %s0, 56
  %v113 = vld [vmem:[%s112] sm:$0xff]
  %114 = xla_tuple %v113
  %115 = xla_tuple %114
  %v116 = vxor.u32 %v113, 2147483648
  %117 = xla_tuple %v116
  %s118 = scalar_lea.vmem %s1, 56
  %119 = vst [vmem:[%s118] sm:$0xff] %v116
  %s120 = scalar_lea.vmem %s0, 120
  %v121 = vld [vmem:[%s120] sm:$0xff]
  %122 = xla_tuple %v121
  %123 = xla_tuple %122
  %v124 = vxor.u32 %v121, 2147483648
  %125 = xla_tuple %v124
  %s126 = scalar_lea.vmem %s1, 120
  %127 = vst [vmem:[%s126] sm:$0xff] %v124

// kernel: _lambda_.2
$region0: #{_lambda_.2}
  #allocation0 [shape = 'u32[]', space=smem, size = 0x4, offset = 0x4, fixed_abs, tag = 'smem constant byte address 0x4 - core index']
  #allocation1 [shape = 'u32[144,128]{1,0:T(1,128)}', space=vmem, size = 0x12000, scoped, tag = 'internal scratch']
  %s0 = inlined_call_operand.vmem [shape: f32[2,64,3], index: 0, kind: input, shape index: {}]
  %s1 = inlined_call_operand.vmem [shape: f32[2,3,64], index: 1, kind: input, shape index: {}]
  %s2 = inlined_call_operand.vmem [shape: f32[2,64,64], index: 2, kind: output, shape index: {}]
  %s3 = sld [smem:[#allocation0]]
  $region18: #{_lambda_.2} parent=0
    _
  %s5 = ssub.s32 1, %s3
  %s6 = scalar_select 0, %s5, %s3
  // Predicated region
  $region2: #{_lambda_.2} parent=0 // pred_check
    _
  $region3: #{_lambda_.2} parent=0 // pred_check_branch
    %8 = sbr.rel (0) target = $region5
  $region4: #{_lambda_.2} parent=0 // pred_region
    _
  $region5: #{_lambda_.2} parent=0 // pred_fallthru
    _
  // Predicated region
  $region6: #{_lambda_.2} parent=0 // pred_check
    _
  $region7: #{_lambda_.2} parent=0 // pred_check_branch
    %10 = sbr.rel (0) target = $region9
  $region8: #{_lambda_.2} parent=0 // pred_region
    _
  $region9: #{_lambda_.2} parent=0 // pred_fallthru
    _
  %v11 = vld [vmem:[%s0] sm:$0xff]
  %v12 = vld [vmem:[%s0 + $0x8] sm:$0xff]
  %v13 = vld [vmem:[%s0 + $0x10] sm:$0xff]
  %v14 = vld [vmem:[%s0 + $0x18] sm:$0xff]
  %v15 = vld [vmem:[%s0 + $0x20] sm:$0xff]
  %v16 = vld [vmem:[%s0 + $0x28] sm:$0xff]
  %v17 = vld [vmem:[%s0 + $0x30] sm:$0xff]
  %v18 = vld [vmem:[%s0 + $0x38] sm:$0xff]
  %v19 = vld [vmem:[%s0 + $0x40] sm:$0xff]
  %v20 = vld [vmem:[%s0 + $0x48] sm:$0xff]
  %v21 = vld [vmem:[%s0 + $0x50] sm:$0xff]
  %v22 = vld [vmem:[%s0 + $0x58] sm:$0xff]
  %v23 = vld [vmem:[%s0 + $0x60] sm:$0xff]
  %v24 = vld [vmem:[%s0 + $0x68] sm:$0xff]
  %v25 = vld [vmem:[%s0 + $0x70] sm:$0xff]
  %v26 = vld [vmem:[%s0 + $0x78] sm:$0xff]
  %v27 = vld [vmem:[%s1] sm:$0x7]
  %v28 = vld [vmem:[%s1 + $0x4] sm:$0x7]
  %30 = vset.pattern.permute.xlu0 0
  %31 = vperm.xlu0 %30, %v11
  %v32 = vpop.permute.xlu0 %31
  %35 = vset.pattern.permute.xlu0 0
  %36 = vperm.xlu0 %35, %v12
  %v37 = vpop.permute.xlu0 %36
  %40 = vset.pattern.permute.xlu0 0
  %41 = vperm.xlu0 %40, %v13
  %v42 = vpop.permute.xlu0 %41
  %45 = vset.pattern.permute.xlu0 0
  %46 = vperm.xlu0 %45, %v14
  %v47 = vpop.permute.xlu0 %46
  %50 = vset.pattern.permute.xlu0 0
  %51 = vperm.xlu0 %50, %v15
  %v52 = vpop.permute.xlu0 %51
  %55 = vset.pattern.permute.xlu0 0
  %56 = vperm.xlu0 %55, %v16
  %v57 = vpop.permute.xlu0 %56
  %60 = vset.pattern.permute.xlu0 0
  %61 = vperm.xlu0 %60, %v17
  %v62 = vpop.permute.xlu0 %61
  %65 = vset.pattern.permute.xlu0 0
  %66 = vperm.xlu0 %65, %v18
  %v67 = vpop.permute.xlu0 %66
  %70 = vset.pattern.permute.xlu0 0
  %71 = vperm.xlu0 %70, %v19
  %v72 = vpop.permute.xlu0 %71
  %75 = vset.pattern.permute.xlu0 0
  %76 = vperm.xlu0 %75, %v20
  %v77 = vpop.permute.xlu0 %76
  %80 = vset.pattern.permute.xlu0 0
  %81 = vperm.xlu0 %80, %v21
  %v82 = vpop.permute.xlu0 %81
  %85 = vset.pattern.permute.xlu0 0
  %86 = vperm.xlu0 %85, %v22
  %v87 = vpop.permute.xlu0 %86
  %90 = vset.pattern.permute.xlu0 0
  %91 = vperm.xlu0 %90, %v23
  %v92 = vpop.permute.xlu0 %91
  %95 = vset.pattern.permute.xlu0 0
  %96 = vperm.xlu0 %95, %v24
  %v97 = vpop.permute.xlu0 %96
  %100 = vset.pattern.permute.xlu0 0
  %101 = vperm.xlu0 %100, %v25
  %v102 = vpop.permute.xlu0 %101
  %105 = vset.pattern.permute.xlu0 0
  %106 = vperm.xlu0 %105, %v26
  %v107 = vpop.permute.xlu0 %106
  %v109 = vlaneseq
  %v110 = vshrl.u32 %v109, 7
  %v111 = vsub.s32 0, %v110
  %v112 = vrot.slane %v27, %v111
  %v113 = vlaneseq
  %v114 = vshrl.u32 %v113, 7
  %v115 = vsub.s32 0, %v114
  %v116 = vrot.slane %v28, %v115
  %v117 = vsub.f32 %v32, %v112
  %v118 = vsub.f32 %v37, %v112
  %v119 = vsub.f32 %v42, %v112
  %v120 = vsub.f32 %v47, %v112
  %v121 = vsub.f32 %v52, %v112
  %v122 = vsub.f32 %v57, %v112
  %v123 = vsub.f32 %v62, %v112
  %v124 = vsub.f32 %v67, %v112
  %v125 = vsub.f32 %v72, %v116
  %v126 = vsub.f32 %v77, %v116
  %v127 = vsub.f32 %v82, %v116
  %v128 = vsub.f32 %v87, %v116
  %v129 = vsub.f32 %v92, %v116
  %v130 = vsub.f32 %v97, %v116
  %v131 = vsub.f32 %v102, %v116
  %v132 = vsub.f32 %v107, %v116
  %v133 = vmul.f32 %v117, %v117
  %v134 = vmul.f32 %v118, %v118
  %v135 = vmul.f32 %v119, %v119
  %v136 = vmul.f32 %v120, %v120
  %v137 = vmul.f32 %v121, %v121
  %v138 = vmul.f32 %v122, %v122
  %v139 = vmul.f32 %v123, %v123
  %v140 = vmul.f32 %v124, %v124
  %v141 = vmul.f32 %v125, %v125
  %v142 = vmul.f32 %v126, %v126
  %v143 = vmul.f32 %v127, %v127
  %v144 = vmul.f32 %v128, %v128
  %v145 = vmul.f32 %v129, %v129
  %v146 = vmul.f32 %v130, %v130
  %v147 = vmul.f32 %v131, %v131
  %v148 = vmul.f32 %v132, %v132
  %149 = vset.pattern.permute.xlu0 1
  %150 = vperm.xlu0 %149, %v11
  %v151 = vpop.permute.xlu0 %150
  %153 = vset.pattern.permute.xlu0 1
  %154 = vperm.xlu0 %153, %v12
  %v155 = vpop.permute.xlu0 %154
  %157 = vset.pattern.permute.xlu0 1
  %158 = vperm.xlu0 %157, %v13
  %v159 = vpop.permute.xlu0 %158
  %161 = vset.pattern.permute.xlu0 1
  %162 = vperm.xlu0 %161, %v14
  %v163 = vpop.permute.xlu0 %162
  %165 = vset.pattern.permute.xlu0 1
  %166 = vperm.xlu0 %165, %v15
  %v167 = vpop.permute.xlu0 %166
  %169 = vset.pattern.permute.xlu0 1
  %170 = vperm.xlu0 %169, %v16
  %v171 = vpop.permute.xlu0 %170
  %173 = vset.pattern.permute.xlu0 1
  %174 = vperm.xlu0 %173, %v17
  %v175 = vpop.permute.xlu0 %174
  %177 = vset.pattern.permute.xlu0 1
  %178 = vperm.xlu0 %177, %v18
  %v179 = vpop.permute.xlu0 %178
  %181 = vset.pattern.permute.xlu0 1
  %182 = vperm.xlu0 %181, %v19
  %v183 = vpop.permute.xlu0 %182
  %185 = vset.pattern.permute.xlu0 1
  %186 = vperm.xlu0 %185, %v20
  %v187 = vpop.permute.xlu0 %186
  %189 = vset.pattern.permute.xlu0 1
  %190 = vperm.xlu0 %189, %v21
  %v191 = vpop.permute.xlu0 %190
  %193 = vset.pattern.permute.xlu0 1
  %194 = vperm.xlu0 %193, %v22
  %v195 = vpop.permute.xlu0 %194
  %197 = vset.pattern.permute.xlu0 1
  %198 = vperm.xlu0 %197, %v23
  %v199 = vpop.permute.xlu0 %198
  %201 = vset.pattern.permute.xlu0 1
  %202 = vperm.xlu0 %201, %v24
  %v203 = vpop.permute.xlu0 %202
  %205 = vset.pattern.permute.xlu0 1
  %206 = vperm.xlu0 %205, %v25
  %v207 = vpop.permute.xlu0 %206
  %209 = vset.pattern.permute.xlu0 1
  %210 = vperm.xlu0 %209, %v26
  %v211 = vpop.permute.xlu0 %210
  %v213 = vlaneseq
  %v214 = vshrl.u32 %v213, 7
  %v215 = vsub.s32 1, %v214
  %v216 = vrot.slane %v27, %v215
  %v217 = vlaneseq
  %v218 = vshrl.u32 %v217, 7
  %v219 = vsub.s32 1, %v218
  %v220 = vrot.slane %v28, %v219
  %v221 = vsub.f32 %v151, %v216
  %v222 = vsub.f32 %v155, %v216
  %v223 = vsub.f32 %v159, %v216
  %v224 = vsub.f32 %v163, %v216
  %v225 = vsub.f32 %v167, %v216
  %v226 = vsub.f32 %v171, %v216
  %v227 = vsub.f32 %v175, %v216
  %v228 = vsub.f32 %v179, %v216
  %v229 = vsub.f32 %v183, %v220
  %v230 = vsub.f32 %v187, %v220
  %v231 = vsub.f32 %v191, %v220
  %v232 = vsub.f32 %v195, %v220
  %v233 = vsub.f32 %v199, %v220
  %v234 = vsub.f32 %v203, %v220
  %v235 = vsub.f32 %v207, %v220
  %v236 = vsub.f32 %v211, %v220
  %v237 = vmul.f32 %v221, %v221
  %v238 = vmul.f32 %v222, %v222
  %v239 = vmul.f32 %v223, %v223
  %v240 = vmul.f32 %v224, %v224
  %v241 = vmul.f32 %v225, %v225
  %v242 = vmul.f32 %v226, %v226
  %v243 = vmul.f32 %v227, %v227
  %v244 = vmul.f32 %v228, %v228
  %v245 = vmul.f32 %v229, %v229
  %v246 = vmul.f32 %v230, %v230
  %v247 = vmul.f32 %v231, %v231
  %v248 = vmul.f32 %v232, %v232
  %v249 = vmul.f32 %v233, %v233
  %v250 = vmul.f32 %v234, %v234
  %v251 = vmul.f32 %v235, %v235
  %v252 = vmul.f32 %v236, %v236
  %v253 = vadd.f32 %v133, %v237
  %v254 = vadd.f32 %v134, %v238
  %v255 = vadd.f32 %v135, %v239
  %v256 = vadd.f32 %v136, %v240
  %v257 = vadd.f32 %v137, %v241
  %v258 = vadd.f32 %v138, %v242
  %v259 = vadd.f32 %v139, %v243
  %v260 = vadd.f32 %v140, %v244
  %v261 = vadd.f32 %v141, %v245
  %v262 = vadd.f32 %v142, %v246
  %v263 = vadd.f32 %v143, %v247
  %v264 = vadd.f32 %v144, %v248
  %v265 = vadd.f32 %v145, %v249
  %v266 = vadd.f32 %v146, %v250
  %v267 = vadd.f32 %v147, %v251
  %v268 = vadd.f32 %v148, %v252
  %269 = vset.pattern.permute.xlu0 2
  %270 = vperm.xlu0 %269, %v11
  %v271 = vpop.permute.xlu0 %270
  %273 = vset.pattern.permute.xlu0 2
  %274 = vperm.xlu0 %273, %v12
  %v275 = vpop.permute.xlu0 %274
  %277 = vset.pattern.permute.xlu0 2
  %278 = vperm.xlu0 %277, %v13
  %v279 = vpop.permute.xlu0 %278
  %281 = vset.pattern.permute.xlu0 2
  %282 = vperm.xlu0 %281, %v14
  %v283 = vpop.permute.xlu0 %282
  %285 = vset.pattern.permute.xlu0 2
  %286 = vperm.xlu0 %285, %v15
  %v287 = vpop.permute.xlu0 %286
  %289 = vset.pattern.permute.xlu0 2
  %290 = vperm.xlu0 %289, %v16
  %v291 = vpop.permute.xlu0 %290
  %293 = vset.pattern.permute.xlu0 2
  %294 = vperm.xlu0 %293, %v17
  %v295 = vpop.permute.xlu0 %294
  %297 = vset.pattern.permute.xlu0 2
  %298 = vperm.xlu0 %297, %v18
  %v299 = vpop.permute.xlu0 %298
  %301 = vset.pattern.permute.xlu0 2
  %302 = vperm.xlu0 %301, %v19
  %v303 = vpop.permute.xlu0 %302
  %305 = vset.pattern.permute.xlu0 2
  %306 = vperm.xlu0 %305, %v20
  %v307 = vpop.permute.xlu0 %306
  %309 = vset.pattern.permute.xlu0 2
  %310 = vperm.xlu0 %309, %v21
  %v311 = vpop.permute.xlu0 %310
  %313 = vset.pattern.permute.xlu0 2
  %314 = vperm.xlu0 %313, %v22
  %v315 = vpop.permute.xlu0 %314
  %317 = vset.pattern.permute.xlu0 2
  %318 = vperm.xlu0 %317, %v23
  %v319 = vpop.permute.xlu0 %318
  %321 = vset.pattern.permute.xlu0 2
  %322 = vperm.xlu0 %321, %v24
  %v323 = vpop.permute.xlu0 %322
  %325 = vset.pattern.permute.xlu0 2
  %326 = vperm.xlu0 %325, %v25
  %v327 = vpop.permute.xlu0 %326
  %329 = vset.pattern.permute.xlu0 2
  %330 = vperm.xlu0 %329, %v26
  %v331 = vpop.permute.xlu0 %330
  %v333 = vlaneseq
  %v334 = vshrl.u32 %v333, 7
  %v335 = vsub.s32 2, %v334
  %v336 = vrot.slane %v27, %v335
  %v337 = vlaneseq
  %v338 = vshrl.u32 %v337, 7
  %v339 = vsub.s32 2, %v338
  %v340 = vrot.slane %v28, %v339
  %v341 = vsub.f32 %v271, %v336
  %v342 = vsub.f32 %v275, %v336
  %v343 = vsub.f32 %v279, %v336
  %v344 = vsub.f32 %v283, %v336
  %v345 = vsub.f32 %v287, %v336
  %v346 = vsub.f32 %v291, %v336
  %v347 = vsub.f32 %v295, %v336
  %v348 = vsub.f32 %v299, %v336
  %v349 = vsub.f32 %v303, %v340
  %v350 = vsub.f32 %v307, %v340
  %v351 = vsub.f32 %v311, %v340
  %v352 = vsub.f32 %v315, %v340
  %v353 = vsub.f32 %v319, %v340
  %v354 = vsub.f32 %v323, %v340
  %v355 = vsub.f32 %v327, %v340
  %v356 = vsub.f32 %v331, %v340
  %v357 = vmul.f32 %v341, %v341
  %v358 = vmul.f32 %v342, %v342
  %v359 = vmul.f32 %v343, %v343
  %v360 = vmul.f32 %v344, %v344
  %v361 = vmul.f32 %v345, %v345
  %v362 = vmul.f32 %v346, %v346
  %v363 = vmul.f32 %v347, %v347
  %v364 = vmul.f32 %v348, %v348
  %v365 = vmul.f32 %v349, %v349
  %v366 = vmul.f32 %v350, %v350
  %v367 = vmul.f32 %v351, %v351
  %v368 = vmul.f32 %v352, %v352
  %v369 = vmul.f32 %v353, %v353
  %v370 = vmul.f32 %v354, %v354
  %v371 = vmul.f32 %v355, %v355
  %v372 = vmul.f32 %v356, %v356
  %v373 = vadd.f32 %v253, %v357
  %v374 = vadd.f32 %v254, %v358
  %v375 = vadd.f32 %v255, %v359
  %v376 = vadd.f32 %v256, %v360
  %v377 = vadd.f32 %v257, %v361
  %v378 = vadd.f32 %v258, %v362
  %v379 = vadd.f32 %v259, %v363
  %v380 = vadd.f32 %v260, %v364
  %v381 = vadd.f32 %v261, %v365
  %v382 = vadd.f32 %v262, %v366
  %v383 = vadd.f32 %v263, %v367
  %v384 = vadd.f32 %v264, %v368
  %v385 = vadd.f32 %v265, %v369
  %v386 = vadd.f32 %v266, %v370
  %v387 = vadd.f32 %v267, %v371
  %v388 = vadd.f32 %v268, %v372
  %vm389 = vcmask 523264
  %390 = vst.msk [vmem:[%s2] sm:$0xff] %vm389, %v373
  %391 = vst.msk [vmem:[%s2 + $0x8] sm:$0xff] %vm389, %v374
  %392 = vst.msk [vmem:[%s2 + $0x10] sm:$0xff] %vm389, %v375
  %393 = vst.msk [vmem:[%s2 + $0x18] sm:$0xff] %vm389, %v376
  %394 = vst.msk [vmem:[%s2 + $0x20] sm:$0xff] %vm389, %v377
  %395 = vst.msk [vmem:[%s2 + $0x28] sm:$0xff] %vm389, %v378
  %396 = vst.msk [vmem:[%s2 + $0x30] sm:$0xff] %vm389, %v379
  %397 = vst.msk [vmem:[%s2 + $0x38] sm:$0xff] %vm389, %v380
  %398 = vst.msk [vmem:[%s2 + $0x40] sm:$0xff] %vm389, %v381
  %399 = vst.msk [vmem:[%s2 + $0x48] sm:$0xff] %vm389, %v382
  %400 = vst.msk [vmem:[%s2 + $0x50] sm:$0xff] %vm389, %v383
  %401 = vst.msk [vmem:[%s2 + $0x58] sm:$0xff] %vm389, %v384
  %402 = vst.msk [vmem:[%s2 + $0x60] sm:$0xff] %vm389, %v385
  %403 = vst.msk [vmem:[%s2 + $0x68] sm:$0xff] %vm389, %v386
  %404 = vst.msk [vmem:[%s2 + $0x70] sm:$0xff] %vm389, %v387
  %405 = vst.msk [vmem:[%s2 + $0x78] sm:$0xff] %vm389, %v388
  // Predicated region
  $region10: #{_lambda_.2} parent=0 // pred_check
    _
  $region11: #{_lambda_.2} parent=0 // pred_check_branch
    %407 = sbr.rel (0) target = $region13
  $region12: #{_lambda_.2} parent=0 // pred_region
    _
  $region13: #{_lambda_.2} parent=0 // pred_fallthru
    _
  // Predicated region
  $region14: #{_lambda_.2} parent=0 // pred_check
    _
  $region15: #{_lambda_.2} parent=0 // pred_check_branch
    %409 = sbr.rel (0) target = $region17
  $region16: #{_lambda_.2} parent=0 // pred_region
    _
  $region17: #{_lambda_.2} parent=0 // pred_fallthru
    _

// kernel: _lambda_.3
$region0: #{_lambda_.3}
  #allocation0 [shape = 'u32[]', space=smem, size = 0x4, offset = 0x4, fixed_abs, tag = 'smem constant byte address 0x4 - core index']
  #allocation1 [shape = 'u32[144,128]{1,0:T(1,128)}', space=vmem, size = 0x12000, scoped, tag = 'internal scratch']
  %s0 = inlined_call_operand.vmem [shape: bf16[128,163], index: 0, kind: input, shape index: {}]
  %s1 = inlined_call_operand.vmem [shape: bf16[672,256], index: 1, kind: input, shape index: {}]
  %s2 = inlined_call_operand.vmem [shape: f32[128,128], index: 2, kind: output, shape index: {}]
  %s3 = sld [smem:[#allocation0]]
  $region18: #{_lambda_.3} parent=0
    _
  %s5 = ssub.s32 1, %s3
  %s6 = scalar_select 0, %s5, %s3
  // Predicated region
  $region2: #{_lambda_.3} parent=0 // pred_check
    _
  $region3: #{_lambda_.3} parent=0 // pred_check_branch
    %8 = sbr.rel (0) target = $region5
  $region4: #{_lambda_.3} parent=0 // pred_region
    _
  $region5: #{_lambda_.3} parent=0 // pred_fallthru
    _
  // Predicated region
  $region6: #{_lambda_.3} parent=0 // pred_check
    _
  $region7: #{_lambda_.3} parent=0 // pred_check_branch
    %10 = sbr.rel (0) target = $region9
  $region8: #{_lambda_.3} parent=0 // pred_region
    _
  $region9: #{_lambda_.3} parent=0 // pred_fallthru
    _
  %v12 = vld [vmem:[%s0] sm:$0xff]
  %v13 = vld [vmem:[%s0 + $0x8] sm:$0xff]
  %v14 = vld [vmem:[%s0 + $0x10] sm:$0xff]
  %v15 = vld [vmem:[%s0 + $0x18] sm:$0xff]
  %v16 = vld [vmem:[%s0 + $0x20] sm:$0xff]
  %v17 = vld [vmem:[%s0 + $0x28] sm:$0xff]
  %v18 = vld [vmem:[%s0 + $0x30] sm:$0xff]
  %v19 = vld [vmem:[%s0 + $0x38] sm:$0xff]
  %v20 = vld [vmem:[%s0 + $0x40] sm:$0xff]
  %v21 = vld [vmem:[%s0 + $0x48] sm:$0xff]
  %v22 = vld [vmem:[%s0 + $0x50] sm:$0xff]
  %v23 = vld [vmem:[%s0 + $0x58] sm:$0xff]
  %v24 = vld [vmem:[%s0 + $0x60] sm:$0xff]
  %v25 = vld [vmem:[%s0 + $0x68] sm:$0xff]
  %v26 = vld [vmem:[%s0 + $0x70] sm:$0xff]
  %v27 = vld [vmem:[%s0 + $0x78] sm:$0xff]
  %v28 = vld [vmem:[%s1] sm:$0xff]
  %v29 = vld [vmem:[%s1 + $0x8] sm:$0xff]
  %v30 = vld [vmem:[%s1 + $0x10] sm:$0xff]
  %v31 = vld [vmem:[%s1 + $0x18] sm:$0xff]
  %v32 = vld [vmem:[%s1 + $0x20] sm:$0x33]
  %v33 = vld [vmem:[%s1 + $0x30] sm:$0x11]
  %v34 = vunpack.c.l.bf16 %v33
  %v35 = vunpack.c.h.bf16 %v33
  %v36 = vlaneseq
  %v37 = vshrl.u32 %v36, 7
  %v38 = vsub.s32 0, %v37
  %v39 = vrot.slane %v34, %v38
  %v40 = vlaneseq
  %v41 = vshrl.u32 %v40, 7
  %v42 = vsub.s32 0, %v41
  %v43 = vrot.slane %v35, %v42
  %v60 = vunpack.c.h.b16 %v12
  %v61 = vunpack.c.h.b16 %v13
  %v62 = vunpack.c.h.b16 %v14
  %v63 = vunpack.c.h.b16 %v15
  %v64 = vunpack.c.h.b16 %v16
  %v65 = vunpack.c.h.b16 %v17
  %v66 = vunpack.c.h.b16 %v18
  %v67 = vunpack.c.h.b16 %v19
  %v68 = vunpack.c.h.b16 %v20
  %v69 = vunpack.c.h.b16 %v21
  %v70 = vunpack.c.h.b16 %v22
  %v71 = vunpack.c.h.b16 %v23
  %v72 = vunpack.c.h.b16 %v24
  %v73 = vunpack.c.h.b16 %v25
  %v74 = vunpack.c.h.b16 %v26
  %v75 = vunpack.c.h.b16 %v27
  %v76 = vpack.c.b16 %v61, %v60
  %v77 = vpack.c.b16 %v63, %v62
  %v78 = vpack.c.b16 %v65, %v64
  %v79 = vpack.c.b16 %v67, %v66
  %v80 = vpack.c.b16 %v69, %v68
  %v81 = vpack.c.b16 %v71, %v70
  %v82 = vpack.c.b16 %v73, %v72
  %v83 = vpack.c.b16 %v75, %v74
  %v89 = vunpack.c.l.b16 %v28
  %v90 = vunpack.c.h.b16 %v28
  %v91 = vunpack.c.l.b16 %v29
  %v92 = vunpack.c.h.b16 %v29
  %v93 = vunpack.c.l.b16 %v30
  %v94 = vunpack.c.h.b16 %v30
  %v95 = vunpack.c.l.b16 %v31
  %v96 = vunpack.c.h.b16 %v31
  %v97 = vunpack.c.l.b16 %v32
  %v98 = vunpack.c.h.b16 %v32
  %v99 = vpack.c.b16 %v91, %v89
  %v100 = vpack.c.b16 %v92, %v90
  %v101 = vpack.c.b16 %v95, %v93
  %v102 = vpack.c.b16 %v96, %v94
  %v103 = vpack.c.b16 %v97, %v97
  %v104 = vpack.c.b16 %v98, %v98
  %vm109 = vcmask 285696
  %v111 = vsel %vm109, %v76, 0
  %v114 = vsel %vm109, %v77, 0
  %v117 = vsel %vm109, %v78, 0
  %v120 = vsel %vm109, %v79, 0
  %v123 = vsel %vm109, %v80, 0
  %v126 = vsel %vm109, %v81, 0
  %v129 = vsel %vm109, %v82, 0
  %v132 = vsel %vm109, %v83, 0
  %vm134 = vcmask 1040384
  %vm135 = vcmask 1041408
  %v136 = vsel %vm134, 4294967295, 65535
  %v137 = vsel %vm135, %v136, 0
  %v139 = vand.u32 %v103, %v137
  %v142 = vand.u32 %v104, %v137
  %144 = vmatprep.subr.bf16.mxu0 0
  %145 = vmatpush1.bf16.msra.mxu0 0
  %146 = vmatprep.subr.bf16.mxu0 0
  %147 = vmatpush1.bf16.msra.mxu0 0
  %148 = vmatprep.subr.bf16.mxu0 0
  %149 = vmatpush1.bf16.msra.mxu0 0
  %150 = vmatprep.subr.bf16.mxu0 0
  %151 = vmatpush1.bf16.msra.mxu0 0
  %152 = vmatprep.subr.bf16.mxu0 0
  %153 = vmatpush1.bf16.msra.mxu0 0
  %154 = vmatprep.subr.bf16.mxu0 %v142
  %155 = vmatpush1.bf16.msra.mxu0 %v139
  %156 = vmatprep.subr.bf16.mxu0 %v102
  %157 = vmatpush1.bf16.msra.mxu0 %v101
  %158 = vmatprep.subr.bf16.mxu0 %v100
  %159 = vmatpush1.bf16.msra.mxu0 %v99
  %160 = vmatprep.subr.bf16.mxu0 0
  %161 = vmatpush2.bf16.msra.mxu0 0
  %162 = vmatprep.subr.bf16.mxu0 0
  %163 = vmatpush2.bf16.msra.mxu0 0
  %164 = vmatprep.subr.bf16.mxu0 0
  %165 = vmatpush2.bf16.msra.mxu0 0
  %166 = vmatprep.subr.bf16.mxu0 0
  %167 = vmatpush2.bf16.msra.mxu0 0
  %168 = vmatprep.subr.bf16.mxu0 0
  %169 = vmatpush2.bf16.msra.mxu0 0
  %170 = vmatprep.subr.bf16.mxu0 0
  %171 = vmatpush2.bf16.msra.mxu0 0
  %172 = vmatprep.subr.bf16.mxu0 0
  %173 = vmatpush2.bf16.msra.mxu0 0
  %174 = vmatprep.subr.bf16.mxu0 0
  %175 = vmatpush2.bf16.msra.mxu0 0
  %176 = vmatprep.mubr.bf16.mxu0 0
  %177 = vmatmul.mubr.bf16.gmra.mxu0 %v111
  %v178 = vpop.f32.mrf.mxu0
  %v179 = vadd.f32 %v39, %v178
  %v180 = vpop.f32.mrf.mxu0
  %v181 = vadd.f32 %v43, %v180
  %v182 = vpop.f32.mrf.mxu0
  %v183 = vadd.f32 %v39, %v182
  %v184 = vpop.f32.mrf.mxu0
  %v185 = vadd.f32 %v43, %v184
  %186 = vmatprep.mubr.bf16.mxu0 0
  %187 = vmatmul.mubr.bf16.gmra.mxu0 %v114
  %v188 = vpop.f32.mrf.mxu0
  %v189 = vadd.f32 %v39, %v188
  %v190 = vpop.f32.mrf.mxu0
  %v191 = vadd.f32 %v43, %v190
  %v192 = vpop.f32.mrf.mxu0
  %v193 = vadd.f32 %v39, %v192
  %v194 = vpop.f32.mrf.mxu0
  %v195 = vadd.f32 %v43, %v194
  %196 = vmatprep.mubr.bf16.mxu0 0
  %197 = vmatmul.mubr.bf16.gmra.mxu0 %v117
  %v198 = vpop.f32.mrf.mxu0
  %v199 = vadd.f32 %v39, %v198
  %v200 = vpop.f32.mrf.mxu0
  %v201 = vadd.f32 %v43, %v200
  %v202 = vpop.f32.mrf.mxu0
  %v203 = vadd.f32 %v39, %v202
  %v204 = vpop.f32.mrf.mxu0
  %v205 = vadd.f32 %v43, %v204
  %206 = vmatprep.mubr.bf16.mxu0 0
  %207 = vmatmul.mubr.bf16.gmra.mxu0 %v120
  %v208 = vpop.f32.mrf.mxu0
  %v209 = vadd.f32 %v39, %v208
  %v210 = vpop.f32.mrf.mxu0
  %v211 = vadd.f32 %v43, %v210
  %v212 = vpop.f32.mrf.mxu0
  %v213 = vadd.f32 %v39, %v212
  %v214 = vpop.f32.mrf.mxu0
  %v215 = vadd.f32 %v43, %v214
  %216 = vmatprep.mubr.bf16.mxu0 0
  %217 = vmatmul.mubr.bf16.gmra.mxu0 %v123
  %v218 = vpop.f32.mrf.mxu0
  %v219 = vadd.f32 %v39, %v218
  %v220 = vpop.f32.mrf.mxu0
  %v221 = vadd.f32 %v43, %v220
  %v222 = vpop.f32.mrf.mxu0
  %v223 = vadd.f32 %v39, %v222
  %v224 = vpop.f32.mrf.mxu0
  %v225 = vadd.f32 %v43, %v224
  %226 = vmatprep.mubr.bf16.mxu0 0
  %227 = vmatmul.mubr.bf16.gmra.mxu0 %v126
  %v228 = vpop.f32.mrf.mxu0
  %v229 = vadd.f32 %v39, %v228
  %v230 = vpop.f32.mrf.mxu0
  %v231 = vadd.f32 %v43, %v230
  %v232 = vpop.f32.mrf.mxu0
  %v233 = vadd.f32 %v39, %v232
  %v234 = vpop.f32.mrf.mxu0
  %v235 = vadd.f32 %v43, %v234
  %236 = vmatprep.mubr.bf16.mxu0 0
  %237 = vmatmul.mubr.bf16.gmra.mxu0 %v129
  %v238 = vpop.f32.mrf.mxu0
  %v239 = vadd.f32 %v39, %v238
  %v240 = vpop.f32.mrf.mxu0
  %v241 = vadd.f32 %v43, %v240
  %v242 = vpop.f32.mrf.mxu0
  %v243 = vadd.f32 %v39, %v242
  %v244 = vpop.f32.mrf.mxu0
  %v245 = vadd.f32 %v43, %v244
  %246 = vmatprep.mubr.bf16.mxu0 0
  %247 = vmatmul.mubr.bf16.gmra.mxu0 %v132
  %v248 = vpop.f32.mrf.mxu0
  %v249 = vadd.f32 %v39, %v248
  %v250 = vpop.f32.mrf.mxu0
  %v251 = vadd.f32 %v43, %v250
  %v252 = vpop.f32.mrf.mxu0
  %v253 = vadd.f32 %v39, %v252
  %v254 = vpop.f32.mrf.mxu0
  %v255 = vadd.f32 %v43, %v254
  %256 = vdwg.mxu0
  %v257 = vmax.f32 %v179, 0.0
  %v258 = vmax.f32 %v181, 0.0
  %v259 = vmax.f32 %v183, 0.0
  %v260 = vmax.f32 %v185, 0.0
  %v261 = vmax.f32 %v189, 0.0
  %v262 = vmax.f32 %v191, 0.0
  %v263 = vmax.f32 %v193, 0.0
  %v264 = vmax.f32 %v195, 0.0
  %v265 = vmax.f32 %v199, 0.0
  %v266 = vmax.f32 %v201, 0.0
  %v267 = vmax.f32 %v203, 0.0
  %v268 = vmax.f32 %v205, 0.0
  %v269 = vmax.f32 %v209, 0.0
  %v270 = vmax.f32 %v211, 0.0
  %v271 = vmax.f32 %v213, 0.0
  %v272 = vmax.f32 %v215, 0.0
  %v273 = vmax.f32 %v219, 0.0
  %v274 = vmax.f32 %v221, 0.0
  %v275 = vmax.f32 %v223, 0.0
  %v276 = vmax.f32 %v225, 0.0
  %v277 = vmax.f32 %v229, 0.0
  %v278 = vmax.f32 %v231, 0.0
  %v279 = vmax.f32 %v233, 0.0
  %v280 = vmax.f32 %v235, 0.0
  %v281 = vmax.f32 %v239, 0.0
  %v282 = vmax.f32 %v241, 0.0
  %v283 = vmax.f32 %v243, 0.0
  %v284 = vmax.f32 %v245, 0.0
  %v285 = vmax.f32 %v249, 0.0
  %v286 = vmax.f32 %v251, 0.0
  %v287 = vmax.f32 %v253, 0.0
  %v288 = vmax.f32 %v255, 0.0
  %v289 = vpack.c.bf16 %v259, %v257
  %v290 = vpack.c.bf16 %v260, %v258
  %v291 = vpack.c.bf16 %v263, %v261
  %v292 = vpack.c.bf16 %v264, %v262
  %v293 = vpack.c.bf16 %v267, %v265
  %v294 = vpack.c.bf16 %v268, %v266
  %v295 = vpack.c.bf16 %v271, %v269
  %v296 = vpack.c.bf16 %v272, %v270
  %v297 = vpack.c.bf16 %v275, %v273
  %v298 = vpack.c.bf16 %v276, %v274
  %v299 = vpack.c.bf16 %v279, %v277
  %v300 = vpack.c.bf16 %v280, %v278
  %v301 = vpack.c.bf16 %v283, %v281
  %v302 = vpack.c.bf16 %v284, %v282
  %v303 = vpack.c.bf16 %v287, %v285
  %v304 = vpack.c.bf16 %v288, %v286
  %v305 = vld [vmem:[%s1 + $0x40] sm:$0xf]
  %v306 = vld [vmem:[%s1 + $0x48] sm:$0xf]
  %v307 = vld [vmem:[%s1 + $0x50] sm:$0xf]
  %v308 = vld [vmem:[%s1 + $0x58] sm:$0xf]
  %v309 = vld [vmem:[%s1 + $0x60] sm:$0xf]
  %v310 = vld [vmem:[%s1 + $0x68] sm:$0xf]
  %v311 = vld [vmem:[%s1 + $0x70] sm:$0xf]
  %v312 = vld [vmem:[%s1 + $0x78] sm:$0xf]
  %v313 = vld [vmem:[%s1 + $0x80] sm:$0xf]
  %v314 = vld [vmem:[%s1 + $0x88] sm:$0xf]
  %v315 = vld [vmem:[%s1 + $0x90] sm:$0xf]
  %v316 = vld [vmem:[%s1 + $0x98] sm:$0xf]
  %v317 = vld [vmem:[%s1 + $0xa0] sm:$0xf]
  %v318 = vld [vmem:[%s1 + $0xa8] sm:$0xf]
  %v319 = vld [vmem:[%s1 + $0xb0] sm:$0xf]
  %v320 = vld [vmem:[%s1 + $0xb8] sm:$0xf]
  %v321 = vld [vmem:[%s1 + $0xc0] sm:$0xf]
  %v322 = vld [vmem:[%s1 + $0xc8] sm:$0xf]
  %v323 = vld [vmem:[%s1 + $0xd0] sm:$0xf]
  %v324 = vld [vmem:[%s1 + $0xd8] sm:$0xf]
  %v325 = vld [vmem:[%s1 + $0xe0] sm:$0xf]
  %v326 = vld [vmem:[%s1 + $0xe8] sm:$0xf]
  %v327 = vld [vmem:[%s1 + $0xf0] sm:$0xf]
  %v328 = vld [vmem:[%s1 + $0xf8] sm:$0xf]
  %v329 = vld [vmem:[%s1 + $0x100] sm:$0xf]
  %v330 = vld [vmem:[%s1 + $0x108] sm:$0xf]
  %v331 = vld [vmem:[%s1 + $0x110] sm:$0xf]
  %v332 = vld [vmem:[%s1 + $0x118] sm:$0xf]
  %v333 = vld [vmem:[%s1 + $0x120] sm:$0xf]
  %v334 = vld [vmem:[%s1 + $0x128] sm:$0xf]
  %v335 = vld [vmem:[%s1 + $0x130] sm:$0xf]
  %v336 = vld [vmem:[%s1 + $0x138] sm:$0xf]
  %v337 = vld [vmem:[%s1 + $0x140] sm:$0x1]
  %v338 = vunpack.c.l.bf16 %v337
  %v339 = vlaneseq
  %v340 = vshrl.u32 %v339, 7
  %v341 = vsub.s32 0, %v340
  %v342 = vrot.slane %v338, %v341
  %v375 = vunpack.c.l.b16 %v305
  %v376 = vunpack.c.l.b16 %v306
  %v377 = vunpack.c.l.b16 %v307
  %v378 = vunpack.c.l.b16 %v308
  %v379 = vunpack.c.l.b16 %v309
  %v380 = vunpack.c.l.b16 %v310
  %v381 = vunpack.c.l.b16 %v311
  %v382 = vunpack.c.l.b16 %v312
  %v383 = vunpack.c.l.b16 %v313
  %v384 = vunpack.c.l.b16 %v314
  %v385 = vunpack.c.l.b16 %v315
  %v386 = vunpack.c.l.b16 %v316
  %v387 = vunpack.c.l.b16 %v317
  %v388 = vunpack.c.l.b16 %v318
  %v389 = vunpack.c.l.b16 %v319
  %v390 = vunpack.c.l.b16 %v320
  %v391 = vunpack.c.l.b16 %v321
  %v392 = vunpack.c.l.b16 %v322
  %v393 = vunpack.c.l.b16 %v323
  %v394 = vunpack.c.l.b16 %v324
  %v395 = vunpack.c.l.b16 %v325
  %v396 = vunpack.c.l.b16 %v326
  %v397 = vunpack.c.l.b16 %v327
  %v398 = vunpack.c.l.b16 %v328
  %v399 = vunpack.c.l.b16 %v329
  %v400 = vunpack.c.l.b16 %v330
  %v401 = vunpack.c.l.b16 %v331
  %v402 = vunpack.c.l.b16 %v332
  %v403 = vunpack.c.l.b16 %v333
  %v404 = vunpack.c.l.b16 %v334
  %v405 = vunpack.c.l.b16 %v335
  %v406 = vunpack.c.l.b16 %v336
  %v407 = vpack.c.b16 %v376, %v375
  %v408 = vpack.c.b16 %v378, %v377
  %v409 = vpack.c.b16 %v380, %v379
  %v410 = vpack.c.b16 %v382, %v381
  %v411 = vpack.c.b16 %v384, %v383
  %v412 = vpack.c.b16 %v386, %v385
  %v413 = vpack.c.b16 %v388, %v387
  %v414 = vpack.c.b16 %v390, %v389
  %v415 = vpack.c.b16 %v392, %v391
  %v416 = vpack.c.b16 %v394, %v393
  %v417 = vpack.c.b16 %v396, %v395
  %v418 = vpack.c.b16 %v398, %v397
  %v419 = vpack.c.b16 %v400, %v399
  %v420 = vpack.c.b16 %v402, %v401
  %v421 = vpack.c.b16 %v404, %v403
  %v422 = vpack.c.b16 %v406, %v405
  %439 = vmatprep.subr.bf16.mxu0 0
  %440 = vmatpush1.bf16.msra.mxu0 %v414
  %441 = vmatprep.subr.bf16.mxu0 0
  %442 = vmatpush1.bf16.msra.mxu0 %v413
  %443 = vmatprep.subr.bf16.mxu0 0
  %444 = vmatpush1.bf16.msra.mxu0 %v412
  %445 = vmatprep.subr.bf16.mxu0 0
  %446 = vmatpush1.bf16.msra.mxu0 %v411
  %447 = vmatprep.subr.bf16.mxu0 0
  %448 = vmatpush1.bf16.msra.mxu0 %v410
  %449 = vmatprep.subr.bf16.mxu0 0
  %450 = vmatpush1.bf16.msra.mxu0 %v409
  %451 = vmatprep.subr.bf16.mxu0 0
  %452 = vmatpush1.bf16.msra.mxu0 %v408
  %453 = vmatprep.subr.bf16.mxu0 0
  %454 = vmatpush1.bf16.msra.mxu0 %v407
  %455 = vmatprep.subr.bf16.mxu0 0
  %456 = vmatpush2.bf16.msra.mxu0 %v422
  %457 = vmatprep.subr.bf16.mxu0 0
  %458 = vmatpush2.bf16.msra.mxu0 %v421
  %459 = vmatprep.subr.bf16.mxu0 0
  %460 = vmatpush2.bf16.msra.mxu0 %v420
  %461 = vmatprep.subr.bf16.mxu0 0
  %462 = vmatpush2.bf16.msra.mxu0 %v419
  %463 = vmatprep.subr.bf16.mxu0 0
  %464 = vmatpush2.bf16.msra.mxu0 %v418
  %465 = vmatprep.subr.bf16.mxu0 0
  %466 = vmatpush2.bf16.msra.mxu0 %v417
  %467 = vmatprep.subr.bf16.mxu0 0
  %468 = vmatpush2.bf16.msra.mxu0 %v416
  %469 = vmatprep.subr.bf16.mxu0 0
  %470 = vmatpush2.bf16.msra.mxu0 %v415
  %471 = vmatprep.mubr.bf16.mxu0 %v290
  %472 = vmatmul.mubr.bf16.gmra.mxu0 %v289
  %v473 = vpop.f32.mrf.mxu0
  %v474 = vadd.f32 %v342, %v473
  %v475 = vpop.f32.mrf.mxu0
  %v476 = vpop.f32.mrf.mxu0
  %v477 = vadd.f32 %v342, %v476
  %v478 = vpop.f32.mrf.mxu0
  %479 = vmatprep.mubr.bf16.mxu0 %v292
  %480 = vmatmul.mubr.bf16.gmra.mxu0 %v291
  %v481 = vpop.f32.mrf.mxu0
  %v482 = vadd.f32 %v342, %v481
  %v483 = vpop.f32.mrf.mxu0
  %v484 = vpop.f32.mrf.mxu0
  %v485 = vadd.f32 %v342, %v484
  %v486 = vpop.f32.mrf.mxu0
  %487 = vmatprep.mubr.bf16.mxu0 %v294
  %488 = vmatmul.mubr.bf16.gmra.mxu0 %v293
  %v489 = vpop.f32.mrf.mxu0
  %v490 = vadd.f32 %v342, %v489
  %v491 = vpop.f32.mrf.mxu0
  %v492 = vpop.f32.mrf.mxu0
  %v493 = vadd.f32 %v342, %v492
  %v494 = vpop.f32.mrf.mxu0
  %495 = vmatprep.mubr.bf16.mxu0 %v296
  %496 = vmatmul.mubr.bf16.gmra.mxu0 %v295
  %v497 = vpop.f32.mrf.mxu0
  %v498 = vadd.f32 %v342, %v497
  %v499 = vpop.f32.mrf.mxu0
  %v500 = vpop.f32.mrf.mxu0
  %v501 = vadd.f32 %v342, %v500
  %v502 = vpop.f32.mrf.mxu0
  %503 = vmatprep.mubr.bf16.mxu0 %v298
  %504 = vmatmul.mubr.bf16.gmra.mxu0 %v297
  %v505 = vpop.f32.mrf.mxu0
  %v506 = vadd.f32 %v342, %v505
  %v507 = vpop.f32.mrf.mxu0
  %v508 = vpop.f32.mrf.mxu0
  %v509 = vadd.f32 %v342, %v508
  %v510 = vpop.f32.mrf.mxu0
  %511 = vmatprep.mubr.bf16.mxu0 %v300
  %512 = vmatmul.mubr.bf16.gmra.mxu0 %v299
  %v513 = vpop.f32.mrf.mxu0
  %v514 = vadd.f32 %v342, %v513
  %v515 = vpop.f32.mrf.mxu0
  %v516 = vpop.f32.mrf.mxu0
  %v517 = vadd.f32 %v342, %v516
  %v518 = vpop.f32.mrf.mxu0
  %519 = vmatprep.mubr.bf16.mxu0 %v302
  %520 = vmatmul.mubr.bf16.gmra.mxu0 %v301
  %v521 = vpop.f32.mrf.mxu0
  %v522 = vadd.f32 %v342, %v521
  %v523 = vpop.f32.mrf.mxu0
  %v524 = vpop.f32.mrf.mxu0
  %v525 = vadd.f32 %v342, %v524
  %v526 = vpop.f32.mrf.mxu0
  %527 = vmatprep.mubr.bf16.mxu0 %v304
  %528 = vmatmul.mubr.bf16.gmra.mxu0 %v303
  %v529 = vpop.f32.mrf.mxu0
  %v530 = vadd.f32 %v342, %v529
  %v531 = vpop.f32.mrf.mxu0
  %v532 = vpop.f32.mrf.mxu0
  %v533 = vadd.f32 %v342, %v532
  %v534 = vpop.f32.mrf.mxu0
  %535 = vdwg.mxu0
  %v536 = vmax.f32 %v474, 0.0
  %v537 = vmax.f32 %v477, 0.0
  %v538 = vmax.f32 %v482, 0.0
  %v539 = vmax.f32 %v485, 0.0
  %v540 = vmax.f32 %v490, 0.0
  %v541 = vmax.f32 %v493, 0.0
  %v542 = vmax.f32 %v498, 0.0
  %v543 = vmax.f32 %v501, 0.0
  %v544 = vmax.f32 %v506, 0.0
  %v545 = vmax.f32 %v509, 0.0
  %v546 = vmax.f32 %v514, 0.0
  %v547 = vmax.f32 %v517, 0.0
  %v548 = vmax.f32 %v522, 0.0
  %v549 = vmax.f32 %v525, 0.0
  %v550 = vmax.f32 %v530, 0.0
  %v551 = vmax.f32 %v533, 0.0
  %v552 = vpack.c.bf16 %v537, %v536
  %v553 = vpack.c.bf16 %v539, %v538
  %v554 = vpack.c.bf16 %v541, %v540
  %v555 = vpack.c.bf16 %v543, %v542
  %v556 = vpack.c.bf16 %v545, %v544
  %v557 = vpack.c.bf16 %v547, %v546
  %v558 = vpack.c.bf16 %v549, %v548
  %v559 = vpack.c.bf16 %v551, %v550
  %v560 = vld [vmem:[%s1 + $0x150] sm:$0xf]
  %v561 = vld [vmem:[%s1 + $0x158] sm:$0xf]
  %v562 = vld [vmem:[%s1 + $0x160] sm:$0xf]
  %v563 = vld [vmem:[%s1 + $0x168] sm:$0xf]
  %v564 = vld [vmem:[%s1 + $0x170] sm:$0xf]
  %v565 = vld [vmem:[%s1 + $0x178] sm:$0xf]
  %v566 = vld [vmem:[%s1 + $0x180] sm:$0xf]
  %v567 = vld [vmem:[%s1 + $0x188] sm:$0xf]
  %v568 = vld [vmem:[%s1 + $0x190] sm:$0xf]
  %v569 = vld [vmem:[%s1 + $0x198] sm:$0xf]
  %v570 = vld [vmem:[%s1 + $0x1a0] sm:$0xf]
  %v571 = vld [vmem:[%s1 + $0x1a8] sm:$0xf]
  %v572 = vld [vmem:[%s1 + $0x1b0] sm:$0xf]
  %v573 = vld [vmem:[%s1 + $0x1b8] sm:$0xf]
  %v574 = vld [vmem:[%s1 + $0x1c0] sm:$0xf]
  %v575 = vld [vmem:[%s1 + $0x1c8] sm:$0xf]
  %v576 = vld [vmem:[%s1 + $0x1d0] sm:$0x1]
  %v577 = vunpack.c.l.bf16 %v576
  %v578 = vlaneseq
  %v579 = vshrl.u32 %v578, 7
  %v580 = vsub.s32 0, %v579
  %v581 = vrot.slane %v577, %v580
  %v598 = vunpack.c.l.b16 %v560
  %v599 = vunpack.c.l.b16 %v561
  %v600 = vunpack.c.l.b16 %v562
  %v601 = vunpack.c.l.b16 %v563
  %v602 = vunpack.c.l.b16 %v564
  %v603 = vunpack.c.l.b16 %v565
  %v604 = vunpack.c.l.b16 %v566
  %v605 = vunpack.c.l.b16 %v567
  %v606 = vunpack.c.l.b16 %v568
  %v607 = vunpack.c.l.b16 %v569
  %v608 = vunpack.c.l.b16 %v570
  %v609 = vunpack.c.l.b16 %v571
  %v610 = vunpack.c.l.b16 %v572
  %v611 = vunpack.c.l.b16 %v573
  %v612 = vunpack.c.l.b16 %v574
  %v613 = vunpack.c.l.b16 %v575
  %v614 = vpack.c.b16 %v599, %v598
  %v615 = vpack.c.b16 %v601, %v600
  %v616 = vpack.c.b16 %v603, %v602
  %v617 = vpack.c.b16 %v605, %v604
  %v618 = vpack.c.b16 %v607, %v606
  %v619 = vpack.c.b16 %v609, %v608
  %v620 = vpack.c.b16 %v611, %v610
  %v621 = vpack.c.b16 %v613, %v612
  %630 = vmatprep.subr.bf16.mxu0 0
  %631 = vmatpush1.bf16.msra.mxu0 %v621
  %632 = vmatprep.subr.bf16.mxu0 0
  %633 = vmatpush1.bf16.msra.mxu0 %v620
  %634 = vmatprep.subr.bf16.mxu0 0
  %635 = vmatpush1.bf16.msra.mxu0 %v619
  %636 = vmatprep.subr.bf16.mxu0 0
  %637 = vmatpush1.bf16.msra.mxu0 %v618
  %638 = vmatprep.subr.bf16.mxu0 0
  %639 = vmatpush1.bf16.msra.mxu0 %v617
  %640 = vmatprep.subr.bf16.mxu0 0
  %641 = vmatpush1.bf16.msra.mxu0 %v616
  %642 = vmatprep.subr.bf16.mxu0 0
  %643 = vmatpush1.bf16.msra.mxu0 %v615
  %644 = vmatprep.subr.bf16.mxu0 0
  %645 = vmatpush1.bf16.msra.mxu0 %v614
  %646 = vmatprep.subr.bf16.mxu0 0
  %647 = vmatpush2.bf16.msra.mxu0 0
  %648 = vmatprep.subr.bf16.mxu0 0
  %649 = vmatpush2.bf16.msra.mxu0 0
  %650 = vmatprep.subr.bf16.mxu0 0
  %651 = vmatpush2.bf16.msra.mxu0 0
  %652 = vmatprep.subr.bf16.mxu0 0
  %653 = vmatpush2.bf16.msra.mxu0 0
  %654 = vmatprep.subr.bf16.mxu0 0
  %655 = vmatpush2.bf16.msra.mxu0 0
  %656 = vmatprep.subr.bf16.mxu0 0
  %657 = vmatpush2.bf16.msra.mxu0 0
  %658 = vmatprep.subr.bf16.mxu0 0
  %659 = vmatpush2.bf16.msra.mxu0 0
  %660 = vmatprep.subr.bf16.mxu0 0
  %661 = vmatpush2.bf16.msra.mxu0 0
  %662 = vmatprep.mubr.bf16.mxu0 0
  %663 = vmatmul.mubr.bf16.gmra.mxu0 %v552
  %v664 = vpop.f32.mrf.mxu0
  %v665 = vadd.f32 %v581, %v664
  %v666 = vpop.f32.mrf.mxu0
  %v667 = vpop.f32.mrf.mxu0
  %v668 = vadd.f32 %v581, %v667
  %v669 = vpop.f32.mrf.mxu0
  %670 = vmatprep.mubr.bf16.mxu0 0
  %671 = vmatmul.mubr.bf16.gmra.mxu0 %v553
  %v672 = vpop.f32.mrf.mxu0
  %v673 = vadd.f32 %v581, %v672
  %v674 = vpop.f32.mrf.mxu0
  %v675 = vpop.f32.mrf.mxu0
  %v676 = vadd.f32 %v581, %v675
  %v677 = vpop.f32.mrf.mxu0
  %678 = vmatprep.mubr.bf16.mxu0 0
  %679 = vmatmul.mubr.bf16.gmra.mxu0 %v554
  %v680 = vpop.f32.mrf.mxu0
  %v681 = vadd.f32 %v581, %v680
  %v682 = vpop.f32.mrf.mxu0
  %v683 = vpop.f32.mrf.mxu0
  %v684 = vadd.f32 %v581, %v683
  %v685 = vpop.f32.mrf.mxu0
  %686 = vmatprep.mubr.bf16.mxu0 0
  %687 = vmatmul.mubr.bf16.gmra.mxu0 %v555
  %v688 = vpop.f32.mrf.mxu0
  %v689 = vadd.f32 %v581, %v688
  %v690 = vpop.f32.mrf.mxu0
  %v691 = vpop.f32.mrf.mxu0
  %v692 = vadd.f32 %v581, %v691
  %v693 = vpop.f32.mrf.mxu0
  %694 = vmatprep.mubr.bf16.mxu0 0
  %695 = vmatmul.mubr.bf16.gmra.mxu0 %v556
  %v696 = vpop.f32.mrf.mxu0
  %v697 = vadd.f32 %v581, %v696
  %v698 = vpop.f32.mrf.mxu0
  %v699 = vpop.f32.mrf.mxu0
  %v700 = vadd.f32 %v581, %v699
  %v701 = vpop.f32.mrf.mxu0
  %702 = vmatprep.mubr.bf16.mxu0 0
  %703 = vmatmul.mubr.bf16.gmra.mxu0 %v557
  %v704 = vpop.f32.mrf.mxu0
  %v705 = vadd.f32 %v581, %v704
  %v706 = vpop.f32.mrf.mxu0
  %v707 = vpop.f32.mrf.mxu0
  %v708 = vadd.f32 %v581, %v707
  %v709 = vpop.f32.mrf.mxu0
  %710 = vmatprep.mubr.bf16.mxu0 0
  %711 = vmatmul.mubr.bf16.gmra.mxu0 %v558
  %v712 = vpop.f32.mrf.mxu0
  %v713 = vadd.f32 %v581, %v712
  %v714 = vpop.f32.mrf.mxu0
  %v715 = vpop.f32.mrf.mxu0
  %v716 = vadd.f32 %v581, %v715
  %v717 = vpop.f32.mrf.mxu0
  %718 = vmatprep.mubr.bf16.mxu0 0
  %719 = vmatmul.mubr.bf16.gmra.mxu0 %v559
  %v720 = vpop.f32.mrf.mxu0
  %v721 = vadd.f32 %v581, %v720
  %v722 = vpop.f32.mrf.mxu0
  %v723 = vpop.f32.mrf.mxu0
  %v724 = vadd.f32 %v581, %v723
  %v725 = vpop.f32.mrf.mxu0
  %726 = vdwg.mxu0
  %v727 = vunpack.c.l.bf16 %v12
  %v728 = vunpack.c.l.bf16 %v13
  %v729 = vunpack.c.l.bf16 %v14
  %v730 = vunpack.c.l.bf16 %v15
  %v731 = vunpack.c.l.bf16 %v16
  %v732 = vunpack.c.l.bf16 %v17
  %v733 = vunpack.c.l.bf16 %v18
  %v734 = vunpack.c.l.bf16 %v19
  %v735 = vunpack.c.l.bf16 %v20
  %v736 = vunpack.c.l.bf16 %v21
  %v737 = vunpack.c.l.bf16 %v22
  %v738 = vunpack.c.l.bf16 %v23
  %v739 = vunpack.c.l.bf16 %v24
  %v740 = vunpack.c.l.bf16 %v25
  %v741 = vunpack.c.l.bf16 %v26
  %v742 = vunpack.c.l.bf16 %v27
  %v743 = vmul.f32 %v665, %v727
  %v744 = vmul.f32 %v668, %v728
  %v745 = vmul.f32 %v673, %v729
  %v746 = vmul.f32 %v676, %v730
  %v747 = vmul.f32 %v681, %v731
  %v748 = vmul.f32 %v684, %v732
  %v749 = vmul.f32 %v689, %v733
  %v750 = vmul.f32 %v692, %v734
  %v751 = vmul.f32 %v697, %v735
  %v752 = vmul.f32 %v700, %v736
  %v753 = vmul.f32 %v705, %v737
  %v754 = vmul.f32 %v708, %v738
  %v755 = vmul.f32 %v713, %v739
  %v756 = vmul.f32 %v716, %v740
  %v757 = vmul.f32 %v721, %v741
  %v758 = vmul.f32 %v724, %v742
  %775 = vrot.lane.b32.xlu0 %v743, 115
  %v776 = vpop.permute.xlu0 %775
  %777 = vrot.lane.b32.xlu0 %v744, 115
  %v778 = vpop.permute.xlu0 %777
  %779 = vrot.lane.b32.xlu0 %v745, 115
  %v780 = vpop.permute.xlu0 %779
  %781 = vrot.lane.b32.xlu0 %v746, 115
  %v782 = vpop.permute.xlu0 %781
  %783 = vrot.lane.b32.xlu0 %v747, 115
  %v784 = vpop.permute.xlu0 %783
  %785 = vrot.lane.b32.xlu0 %v748, 115
  %v786 = vpop.permute.xlu0 %785
  %787 = vrot.lane.b32.xlu0 %v749, 115
  %v788 = vpop.permute.xlu0 %787
  %789 = vrot.lane.b32.xlu0 %v750, 115
  %v790 = vpop.permute.xlu0 %789
  %791 = vrot.lane.b32.xlu0 %v751, 115
  %v792 = vpop.permute.xlu0 %791
  %793 = vrot.lane.b32.xlu0 %v752, 115
  %v794 = vpop.permute.xlu0 %793
  %795 = vrot.lane.b32.xlu0 %v753, 115
  %v796 = vpop.permute.xlu0 %795
  %797 = vrot.lane.b32.xlu0 %v754, 115
  %v798 = vpop.permute.xlu0 %797
  %799 = vrot.lane.b32.xlu0 %v755, 115
  %v800 = vpop.permute.xlu0 %799
  %801 = vrot.lane.b32.xlu0 %v756, 115
  %v802 = vpop.permute.xlu0 %801
  %803 = vrot.lane.b32.xlu0 %v757, 115
  %v804 = vpop.permute.xlu0 %803
  %805 = vrot.lane.b32.xlu0 %v758, 115
  %v806 = vpop.permute.xlu0 %805
  %v823 = vmax.f32 %v743, %v776
  %v824 = vmax.f32 %v744, %v778
  %v825 = vmax.f32 %v745, %v780
  %v826 = vmax.f32 %v746, %v782
  %v827 = vmax.f32 %v747, %v784
  %v828 = vmax.f32 %v748, %v786
  %v829 = vmax.f32 %v749, %v788
  %v830 = vmax.f32 %v750, %v790
  %v831 = vmax.f32 %v751, %v792
  %v832 = vmax.f32 %v752, %v794
  %v833 = vmax.f32 %v753, %v796
  %v834 = vmax.f32 %v754, %v798
  %v835 = vmax.f32 %v755, %v800
  %v836 = vmax.f32 %v756, %v802
  %v837 = vmax.f32 %v757, %v804
  %v838 = vmax.f32 %v758, %v806
  %855 = vrot.lane.b32.xlu0 %v823, 102
  %v856 = vpop.permute.xlu0 %855
  %857 = vrot.lane.b32.xlu0 %v824, 102
  %v858 = vpop.permute.xlu0 %857
  %859 = vrot.lane.b32.xlu0 %v825, 102
  %v860 = vpop.permute.xlu0 %859
  %861 = vrot.lane.b32.xlu0 %v826, 102
  %v862 = vpop.permute.xlu0 %861
  %863 = vrot.lane.b32.xlu0 %v827, 102
  %v864 = vpop.permute.xlu0 %863
  %865 = vrot.lane.b32.xlu0 %v828, 102
  %v866 = vpop.permute.xlu0 %865
  %867 = vrot.lane.b32.xlu0 %v829, 102
  %v868 = vpop.permute.xlu0 %867
  %869 = vrot.lane.b32.xlu0 %v830, 102
  %v870 = vpop.permute.xlu0 %869
  %871 = vrot.lane.b32.xlu0 %v831, 102
  %v872 = vpop.permute.xlu0 %871
  %873 = vrot.lane.b32.xlu0 %v832, 102
  %v874 = vpop.permute.xlu0 %873
  %875 = vrot.lane.b32.xlu0 %v833, 102
  %v876 = vpop.permute.xlu0 %875
  %877 = vrot.lane.b32.xlu0 %v834, 102
  %v878 = vpop.permute.xlu0 %877
  %879 = vrot.lane.b32.xlu0 %v835, 102
  %v880 = vpop.permute.xlu0 %879
  %881 = vrot.lane.b32.xlu0 %v836, 102
  %v882 = vpop.permute.xlu0 %881
  %883 = vrot.lane.b32.xlu0 %v837, 102
  %v884 = vpop.permute.xlu0 %883
  %885 = vrot.lane.b32.xlu0 %v838, 102
  %v886 = vpop.permute.xlu0 %885
  %v903 = vmax.f32 %v823, %v856
  %v904 = vmax.f32 %v824, %v858
  %v905 = vmax.f32 %v825, %v860
  %v906 = vmax.f32 %v826, %v862
  %v907 = vmax.f32 %v827, %v864
  %v908 = vmax.f32 %v828, %v866
  %v909 = vmax.f32 %v829, %v868
  %v910 = vmax.f32 %v830, %v870
  %v911 = vmax.f32 %v831, %v872
  %v912 = vmax.f32 %v832, %v874
  %v913 = vmax.f32 %v833, %v876
  %v914 = vmax.f32 %v834, %v878
  %v915 = vmax.f32 %v835, %v880
  %v916 = vmax.f32 %v836, %v882
  %v917 = vmax.f32 %v837, %v884
  %v918 = vmax.f32 %v838, %v886
  %935 = vrot.lane.b32.xlu0 %v903, 76
  %v936 = vpop.permute.xlu0 %935
  %937 = vrot.lane.b32.xlu0 %v904, 76
  %v938 = vpop.permute.xlu0 %937
  %939 = vrot.lane.b32.xlu0 %v905, 76
  %v940 = vpop.permute.xlu0 %939
  %941 = vrot.lane.b32.xlu0 %v906, 76
  %v942 = vpop.permute.xlu0 %941
  %943 = vrot.lane.b32.xlu0 %v907, 76
  %v944 = vpop.permute.xlu0 %943
  %945 = vrot.lane.b32.xlu0 %v908, 76
  %v946 = vpop.permute.xlu0 %945
  %947 = vrot.lane.b32.xlu0 %v909, 76
  %v948 = vpop.permute.xlu0 %947
  %949 = vrot.lane.b32.xlu0 %v910, 76
  %v950 = vpop.permute.xlu0 %949
  %951 = vrot.lane.b32.xlu0 %v911, 76
  %v952 = vpop.permute.xlu0 %951
  %953 = vrot.lane.b32.xlu0 %v912, 76
  %v954 = vpop.permute.xlu0 %953
  %955 = vrot.lane.b32.xlu0 %v913, 76
  %v956 = vpop.permute.xlu0 %955
  %957 = vrot.lane.b32.xlu0 %v914, 76
  %v958 = vpop.permute.xlu0 %957
  %959 = vrot.lane.b32.xlu0 %v915, 76
  %v960 = vpop.permute.xlu0 %959
  %961 = vrot.lane.b32.xlu0 %v916, 76
  %v962 = vpop.permute.xlu0 %961
  %963 = vrot.lane.b32.xlu0 %v917, 76
  %v964 = vpop.permute.xlu0 %963
  %965 = vrot.lane.b32.xlu0 %v918, 76
  %v966 = vpop.permute.xlu0 %965
  %v983 = vmax.f32 %v903, %v936
  %v984 = vmax.f32 %v904, %v938
  %v985 = vmax.f32 %v905, %v940
  %v986 = vmax.f32 %v906, %v942
  %v987 = vmax.f32 %v907, %v944
  %v988 = vmax.f32 %v908, %v946
  %v989 = vmax.f32 %v909, %v948
  %v990 = vmax.f32 %v910, %v950
  %v991 = vmax.f32 %v911, %v952
  %v992 = vmax.f32 %v912, %v954
  %v993 = vmax.f32 %v913, %v956
  %v994 = vmax.f32 %v914, %v958
  %v995 = vmax.f32 %v915, %v960
  %v996 = vmax.f32 %v916, %v962
  %v997 = vmax.f32 %v917, %v964
  %v998 = vmax.f32 %v918, %v966
  %v999 = vmax.f32 %v983, 0.0
  %v1000 = vmax.f32 %v984, 0.0
  %v1001 = vmax.f32 %v985, 0.0
  %v1002 = vmax.f32 %v986, 0.0
  %v1003 = vmax.f32 %v987, 0.0
  %v1004 = vmax.f32 %v988, 0.0
  %v1005 = vmax.f32 %v989, 0.0
  %v1006 = vmax.f32 %v990, 0.0
  %v1007 = vmax.f32 %v991, 0.0
  %v1008 = vmax.f32 %v992, 0.0
  %v1009 = vmax.f32 %v993, 0.0
  %v1010 = vmax.f32 %v994, 0.0
  %v1011 = vmax.f32 %v995, 0.0
  %v1012 = vmax.f32 %v996, 0.0
  %v1013 = vmax.f32 %v997, 0.0
  %v1014 = vmax.f32 %v998, 0.0
  %1015 = vrot.lane.b32.xlu0 %v743, 125
  %v1016 = vpop.permute.xlu0 %1015
  %1017 = vrot.lane.b32.xlu0 %v744, 125
  %v1018 = vpop.permute.xlu0 %1017
  %1019 = vrot.lane.b32.xlu0 %v745, 125
  %v1020 = vpop.permute.xlu0 %1019
  %1021 = vrot.lane.b32.xlu0 %v746, 125
  %v1022 = vpop.permute.xlu0 %1021
  %1023 = vrot.lane.b32.xlu0 %v747, 125
  %v1024 = vpop.permute.xlu0 %1023
  %1025 = vrot.lane.b32.xlu0 %v748, 125
  %v1026 = vpop.permute.xlu0 %1025
  %1027 = vrot.lane.b32.xlu0 %v749, 125
  %v1028 = vpop.permute.xlu0 %1027
  %1029 = vrot.lane.b32.xlu0 %v750, 125
  %v1030 = vpop.permute.xlu0 %1029
  %1031 = vrot.lane.b32.xlu0 %v751, 125
  %v1032 = vpop.permute.xlu0 %1031
  %1033 = vrot.lane.b32.xlu0 %v752, 125
  %v1034 = vpop.permute.xlu0 %1033
  %1035 = vrot.lane.b32.xlu0 %v753, 125
  %v1036 = vpop.permute.xlu0 %1035
  %1037 = vrot.lane.b32.xlu0 %v754, 125
  %v1038 = vpop.permute.xlu0 %1037
  %1039 = vrot.lane.b32.xlu0 %v755, 125
  %v1040 = vpop.permute.xlu0 %1039
  %1041 = vrot.lane.b32.xlu0 %v756, 125
  %v1042 = vpop.permute.xlu0 %1041
  %1043 = vrot.lane.b32.xlu0 %v757, 125
  %v1044 = vpop.permute.xlu0 %1043
  %1045 = vrot.lane.b32.xlu0 %v758, 125
  %v1046 = vpop.permute.xlu0 %1045
  %v1063 = vmax.f32 %v743, %v1016
  %v1064 = vmax.f32 %v744, %v1018
  %v1065 = vmax.f32 %v745, %v1020
  %v1066 = vmax.f32 %v746, %v1022
  %v1067 = vmax.f32 %v747, %v1024
  %v1068 = vmax.f32 %v748, %v1026
  %v1069 = vmax.f32 %v749, %v1028
  %v1070 = vmax.f32 %v750, %v1030
  %v1071 = vmax.f32 %v751, %v1032
  %v1072 = vmax.f32 %v752, %v1034
  %v1073 = vmax.f32 %v753, %v1036
  %v1074 = vmax.f32 %v754, %v1038
  %v1075 = vmax.f32 %v755, %v1040
  %v1076 = vmax.f32 %v756, %v1042
  %v1077 = vmax.f32 %v757, %v1044
  %v1078 = vmax.f32 %v758, %v1046
  %1095 = vrot.lane.b32.xlu0 %v1063, 122
  %v1096 = vpop.permute.xlu0 %1095
  %1097 = vrot.lane.b32.xlu0 %v1064, 122
  %v1098 = vpop.permute.xlu0 %1097
  %1099 = vrot.lane.b32.xlu0 %v1065, 122
  %v1100 = vpop.permute.xlu0 %1099
  %1101 = vrot.lane.b32.xlu0 %v1066, 122
  %v1102 = vpop.permute.xlu0 %1101
  %1103 = vrot.lane.b32.xlu0 %v1067, 122
  %v1104 = vpop.permute.xlu0 %1103
  %1105 = vrot.lane.b32.xlu0 %v1068, 122
  %v1106 = vpop.permute.xlu0 %1105
  %1107 = vrot.lane.b32.xlu0 %v1069, 122
  %v1108 = vpop.permute.xlu0 %1107
  %1109 = vrot.lane.b32.xlu0 %v1070, 122
  %v1110 = vpop.permute.xlu0 %1109
  %1111 = vrot.lane.b32.xlu0 %v1071, 122
  %v1112 = vpop.permute.xlu0 %1111
  %1113 = vrot.lane.b32.xlu0 %v1072, 122
  %v1114 = vpop.permute.xlu0 %1113
  %1115 = vrot.lane.b32.xlu0 %v1073, 122
  %v1116 = vpop.permute.xlu0 %1115
  %1117 = vrot.lane.b32.xlu0 %v1074, 122
  %v1118 = vpop.permute.xlu0 %1117
  %1119 = vrot.lane.b32.xlu0 %v1075, 122
  %v1120 = vpop.permute.xlu0 %1119
  %1121 = vrot.lane.b32.xlu0 %v1076, 122
  %v1122 = vpop.permute.xlu0 %1121
  %1123 = vrot.lane.b32.xlu0 %v1077, 122
  %v1124 = vpop.permute.xlu0 %1123
  %1125 = vrot.lane.b32.xlu0 %v1078, 122
  %v1126 = vpop.permute.xlu0 %1125
  %v1143 = vmax.f32 %v1063, %v1096
  %v1144 = vmax.f32 %v1064, %v1098
  %v1145 = vmax.f32 %v1065, %v1100
  %v1146 = vmax.f32 %v1066, %v1102
  %v1147 = vmax.f32 %v1067, %v1104
  %v1148 = vmax.f32 %v1068, %v1106
  %v1149 = vmax.f32 %v1069, %v1108
  %v1150 = vmax.f32 %v1070, %v1110
  %v1151 = vmax.f32 %v1071, %v1112
  %v1152 = vmax.f32 %v1072, %v1114
  %v1153 = vmax.f32 %v1073, %v1116
  %v1154 = vmax.f32 %v1074, %v1118
  %v1155 = vmax.f32 %v1075, %v1120
  %v1156 = vmax.f32 %v1076, %v1122
  %v1157 = vmax.f32 %v1077, %v1124
  %v1158 = vmax.f32 %v1078, %v1126
  %1175 = vrot.lane.b32.xlu0 %v1143, 116
  %v1176 = vpop.permute.xlu0 %1175
  %1177 = vrot.lane.b32.xlu0 %v1144, 116
  %v1178 = vpop.permute.xlu0 %1177
  %1179 = vrot.lane.b32.xlu0 %v1145, 116
  %v1180 = vpop.permute.xlu0 %1179
  %1181 = vrot.lane.b32.xlu0 %v1146, 116
  %v1182 = vpop.permute.xlu0 %1181
  %1183 = vrot.lane.b32.xlu0 %v1147, 116
  %v1184 = vpop.permute.xlu0 %1183
  %1185 = vrot.lane.b32.xlu0 %v1148, 116
  %v1186 = vpop.permute.xlu0 %1185
  %1187 = vrot.lane.b32.xlu0 %v1149, 116
  %v1188 = vpop.permute.xlu0 %1187
  %1189 = vrot.lane.b32.xlu0 %v1150, 116
  %v1190 = vpop.permute.xlu0 %1189
  %1191 = vrot.lane.b32.xlu0 %v1151, 116
  %v1192 = vpop.permute.xlu0 %1191
  %1193 = vrot.lane.b32.xlu0 %v1152, 116
  %v1194 = vpop.permute.xlu0 %1193
  %1195 = vrot.lane.b32.xlu0 %v1153, 116
  %v1196 = vpop.permute.xlu0 %1195
  %1197 = vrot.lane.b32.xlu0 %v1154, 116
  %v1198 = vpop.permute.xlu0 %1197
  %1199 = vrot.lane.b32.xlu0 %v1155, 116
  %v1200 = vpop.permute.xlu0 %1199
  %1201 = vrot.lane.b32.xlu0 %v1156, 116
  %v1202 = vpop.permute.xlu0 %1201
  %1203 = vrot.lane.b32.xlu0 %v1157, 116
  %v1204 = vpop.permute.xlu0 %1203
  %1205 = vrot.lane.b32.xlu0 %v1158, 116
  %v1206 = vpop.permute.xlu0 %1205
  %v1223 = vmax.f32 %v1143, %v1176
  %v1224 = vmax.f32 %v1144, %v1178
  %v1225 = vmax.f32 %v1145, %v1180
  %v1226 = vmax.f32 %v1146, %v1182
  %v1227 = vmax.f32 %v1147, %v1184
  %v1228 = vmax.f32 %v1148, %v1186
  %v1229 = vmax.f32 %v1149, %v1188
  %v1230 = vmax.f32 %v1150, %v1190
  %v1231 = vmax.f32 %v1151, %v1192
  %v1232 = vmax.f32 %v1152, %v1194
  %v1233 = vmax.f32 %v1153, %v1196
  %v1234 = vmax.f32 %v1154, %v1198
  %v1235 = vmax.f32 %v1155, %v1200
  %v1236 = vmax.f32 %v1156, %v1202
  %v1237 = vmax.f32 %v1157, %v1204
  %v1238 = vmax.f32 %v1158, %v1206
  %v1239 = vmax.f32 %v1223, 0.0
  %v1240 = vmax.f32 %v1224, 0.0
  %v1241 = vmax.f32 %v1225, 0.0
  %v1242 = vmax.f32 %v1226, 0.0
  %v1243 = vmax.f32 %v1227, 0.0
  %v1244 = vmax.f32 %v1228, 0.0
  %v1245 = vmax.f32 %v1229, 0.0
  %v1246 = vmax.f32 %v1230, 0.0
  %v1247 = vmax.f32 %v1231, 0.0
  %v1248 = vmax.f32 %v1232, 0.0
  %v1249 = vmax.f32 %v1233, 0.0
  %v1250 = vmax.f32 %v1234, 0.0
  %v1251 = vmax.f32 %v1235, 0.0
  %v1252 = vmax.f32 %v1236, 0.0
  %v1253 = vmax.f32 %v1237, 0.0
  %v1254 = vmax.f32 %v1238, 0.0
  %v1255 = vpack.c.bf16 %v1000, %v999
  %v1256 = vpack.c.bf16 %v1002, %v1001
  %v1257 = vpack.c.bf16 %v1004, %v1003
  %v1258 = vpack.c.bf16 %v1006, %v1005
  %v1259 = vpack.c.bf16 %v1008, %v1007
  %v1260 = vpack.c.bf16 %v1010, %v1009
  %v1261 = vpack.c.bf16 %v1012, %v1011
  %v1262 = vpack.c.bf16 %v1014, %v1013
  %v1263 = vld [vmem:[%s1 + $0x1e0] sm:$0xf]
  %v1264 = vld [vmem:[%s1 + $0x1e8] sm:$0x7]
  %v1265 = vpack.c.bf16 %v1240, %v1239
  %v1266 = vpack.c.bf16 %v1242, %v1241
  %v1267 = vpack.c.bf16 %v1244, %v1243
  %v1268 = vpack.c.bf16 %v1246, %v1245
  %v1269 = vpack.c.bf16 %v1248, %v1247
  %v1270 = vpack.c.bf16 %v1250, %v1249
  %v1271 = vpack.c.bf16 %v1252, %v1251
  %v1272 = vpack.c.bf16 %v1254, %v1253
  %v1273 = vld [vmem:[%s1 + $0x1f0] sm:$0x3]
  %1282 = vrot.lane.b32.xlu0 %v1265, 24
  %v1283 = vpop.permute.xlu0 %1282
  %1284 = vrot.lane.b32.xlu0 %v1266, 24
  %v1285 = vpop.permute.xlu0 %1284
  %1286 = vrot.lane.b32.xlu0 %v1267, 24
  %v1287 = vpop.permute.xlu0 %1286
  %1288 = vrot.lane.b32.xlu0 %v1268, 24
  %v1289 = vpop.permute.xlu0 %1288
  %1290 = vrot.lane.b32.xlu0 %v1269, 24
  %v1291 = vpop.permute.xlu0 %1290
  %1292 = vrot.lane.b32.xlu0 %v1270, 24
  %v1293 = vpop.permute.xlu0 %1292
  %1294 = vrot.lane.b32.xlu0 %v1271, 24
  %v1295 = vpop.permute.xlu0 %1294
  %1296 = vrot.lane.b32.xlu0 %v1272, 24
  %v1297 = vpop.permute.xlu0 %1296
  %vm1298 = vcmask 23552
  %v1300 = vsel %vm1298, %v1283, 0
  %v1303 = vsel %vm1298, %v1285, 0
  %v1306 = vsel %vm1298, %v1287, 0
  %v1309 = vsel %vm1298, %v1289, 0
  %v1312 = vsel %vm1298, %v1291, 0
  %v1315 = vsel %vm1298, %v1293, 0
  %v1318 = vsel %vm1298, %v1295, 0
  %v1321 = vsel %vm1298, %v1297, 0
  %v1324 = vand.u32 %v1273, %v137
  %1326 = vmatprep.subr.bf16.mxu0 0
  %1327 = vmatpush1.bf16.msra.mxu0 0
  %1328 = vmatprep.subr.bf16.mxu0 0
  %1329 = vmatpush1.bf16.msra.mxu0 0
  %1330 = vmatprep.subr.bf16.mxu0 0
  %1331 = vmatpush1.bf16.msra.mxu0 0
  %1332 = vmatprep.subr.bf16.mxu0 0
  %1333 = vmatpush1.bf16.msra.mxu0 0
  %1334 = vmatprep.subr.bf16.mxu0 0
  %1335 = vmatpush1.bf16.msra.mxu0 0
  %1336 = vmatprep.subr.bf16.mxu0 0
  %1337 = vmatpush1.bf16.msra.mxu0 0
  %1338 = vmatprep.subr.bf16.mxu0 0
  %1339 = vmatpush1.bf16.msra.mxu0 0
  %1340 = vmatprep.subr.bf16.mxu0 0
  %1341 = vmatpush1.bf16.msra.mxu0 %v1324
  %1342 = vmatprep.subr.bf16.mxu0 0
  %1343 = vmatpush2.bf16.msra.mxu0 0
  %1344 = vmatprep.subr.bf16.mxu0 0
  %1345 = vmatpush2.bf16.msra.mxu0 0
  %1346 = vmatprep.subr.bf16.mxu0 0
  %1347 = vmatpush2.bf16.msra.mxu0 0
  %1348 = vmatprep.subr.bf16.mxu0 0
  %1349 = vmatpush2.bf16.msra.mxu0 0
  %1350 = vmatprep.subr.bf16.mxu0 0
  %1351 = vmatpush2.bf16.msra.mxu0 0
  %1352 = vmatprep.subr.bf16.mxu0 0
  %1353 = vmatpush2.bf16.msra.mxu0 0
  %1354 = vmatprep.subr.bf16.mxu0 0
  %1355 = vmatpush2.bf16.msra.mxu0 0
  %1356 = vmatprep.subr.bf16.mxu0 0
  %1357 = vmatpush2.bf16.msra.mxu0 0
  %1358 = vmatprep.mubr.bf16.mxu0 0
  %1359 = vmatmul.mubr.bf16.gmra.mxu0 %v1300
  %v1360 = vpop.f32.mrf.mxu0
  %v1361 = vadd.f32 0.0, %v1360
  %v1362 = vpop.f32.mrf.mxu0
  %v1363 = vpop.f32.mrf.mxu0
  %v1364 = vadd.f32 0.0, %v1363
  %v1365 = vpop.f32.mrf.mxu0
  %1366 = vmatprep.mubr.bf16.mxu0 0
  %1367 = vmatmul.mubr.bf16.gmra.mxu0 %v1303
  %v1368 = vpop.f32.mrf.mxu0
  %v1369 = vadd.f32 0.0, %v1368
  %v1370 = vpop.f32.mrf.mxu0
  %v1371 = vpop.f32.mrf.mxu0
  %v1372 = vadd.f32 0.0, %v1371
  %v1373 = vpop.f32.mrf.mxu0
  %1374 = vmatprep.mubr.bf16.mxu0 0
  %1375 = vmatmul.mubr.bf16.gmra.mxu0 %v1306
  %v1376 = vpop.f32.mrf.mxu0
  %v1377 = vadd.f32 0.0, %v1376
  %v1378 = vpop.f32.mrf.mxu0
  %v1379 = vpop.f32.mrf.mxu0
  %v1380 = vadd.f32 0.0, %v1379
  %v1381 = vpop.f32.mrf.mxu0
  %1382 = vmatprep.mubr.bf16.mxu0 0
  %1383 = vmatmul.mubr.bf16.gmra.mxu0 %v1309
  %v1384 = vpop.f32.mrf.mxu0
  %v1385 = vadd.f32 0.0, %v1384
  %v1386 = vpop.f32.mrf.mxu0
  %v1387 = vpop.f32.mrf.mxu0
  %v1388 = vadd.f32 0.0, %v1387
  %v1389 = vpop.f32.mrf.mxu0
  %1390 = vmatprep.mubr.bf16.mxu0 0
  %1391 = vmatmul.mubr.bf16.gmra.mxu0 %v1312
  %v1392 = vpop.f32.mrf.mxu0
  %v1393 = vadd.f32 0.0, %v1392
  %v1394 = vpop.f32.mrf.mxu0
  %v1395 = vpop.f32.mrf.mxu0
  %v1396 = vadd.f32 0.0, %v1395
  %v1397 = vpop.f32.mrf.mxu0
  %1398 = vmatprep.mubr.bf16.mxu0 0
  %1399 = vmatmul.mubr.bf16.gmra.mxu0 %v1315
  %v1400 = vpop.f32.mrf.mxu0
  %v1401 = vadd.f32 0.0, %v1400
  %v1402 = vpop.f32.mrf.mxu0
  %v1403 = vpop.f32.mrf.mxu0
  %v1404 = vadd.f32 0.0, %v1403
  %v1405 = vpop.f32.mrf.mxu0
  %1406 = vmatprep.mubr.bf16.mxu0 0
  %1407 = vmatmul.mubr.bf16.gmra.mxu0 %v1318
  %v1408 = vpop.f32.mrf.mxu0
  %v1409 = vadd.f32 0.0, %v1408
  %v1410 = vpop.f32.mrf.mxu0
  %v1411 = vpop.f32.mrf.mxu0
  %v1412 = vadd.f32 0.0, %v1411
  %v1413 = vpop.f32.mrf.mxu0
  %1414 = vmatprep.mubr.bf16.mxu0 0
  %1415 = vmatmul.mubr.bf16.gmra.mxu0 %v1321
  %v1416 = vpop.f32.mrf.mxu0
  %v1417 = vadd.f32 0.0, %v1416
  %v1418 = vpop.f32.mrf.mxu0
  %v1419 = vpop.f32.mrf.mxu0
  %v1420 = vadd.f32 0.0, %v1419
  %v1421 = vpop.f32.mrf.mxu0
  %1422 = vdwg.mxu0
  %v1425 = vunpack.c.l.b16 %v1263
  %v1426 = vunpack.c.l.b16 %v1264
  %v1427 = vpack.c.b16 %v1426, %v1425
  %vm1428 = vcmask 105472
  %v1430 = vsel %vm1428, %v1255, 0
  %v1433 = vsel %vm1428, %v1256, 0
  %v1436 = vsel %vm1428, %v1257, 0
  %v1439 = vsel %vm1428, %v1258, 0
  %v1442 = vsel %vm1428, %v1259, 0
  %v1445 = vsel %vm1428, %v1260, 0
  %v1448 = vsel %vm1428, %v1261, 0
  %v1451 = vsel %vm1428, %v1262, 0
  %vm1453 = vcmask 1045504
  %vm1454 = vcmask 1046528
  %v1455 = vsel %vm1453, 4294967295, 65535
  %v1456 = vsel %vm1454, %v1455, 0
  %v1458 = vand.u32 %v1427, %v1456
  %1460 = vmatprep.subr.bf16.mxu0 0
  %1461 = vmatpush1.bf16.msra.mxu0 0
  %1462 = vmatprep.subr.bf16.mxu0 0
  %1463 = vmatpush1.bf16.msra.mxu0 0
  %1464 = vmatprep.subr.bf16.mxu0 0
  %1465 = vmatpush1.bf16.msra.mxu0 0
  %1466 = vmatprep.subr.bf16.mxu0 0
  %1467 = vmatpush1.bf16.msra.mxu0 0
  %1468 = vmatprep.subr.bf16.mxu0 0
  %1469 = vmatpush1.bf16.msra.mxu0 0
  %1470 = vmatprep.subr.bf16.mxu0 0
  %1471 = vmatpush1.bf16.msra.mxu0 0
  %1472 = vmatprep.subr.bf16.mxu0 0
  %1473 = vmatpush1.bf16.msra.mxu0 0
  %1474 = vmatprep.subr.bf16.mxu0 0
  %1475 = vmatpush1.bf16.msra.mxu0 %v1458
  %1476 = vmatprep.subr.bf16.mxu0 0
  %1477 = vmatpush2.bf16.msra.mxu0 0
  %1478 = vmatprep.subr.bf16.mxu0 0
  %1479 = vmatpush2.bf16.msra.mxu0 0
  %1480 = vmatprep.subr.bf16.mxu0 0
  %1481 = vmatpush2.bf16.msra.mxu0 0
  %1482 = vmatprep.subr.bf16.mxu0 0
  %1483 = vmatpush2.bf16.msra.mxu0 0
  %1484 = vmatprep.subr.bf16.mxu0 0
  %1485 = vmatpush2.bf16.msra.mxu0 0
  %1486 = vmatprep.subr.bf16.mxu0 0
  %1487 = vmatpush2.bf16.msra.mxu0 0
  %1488 = vmatprep.subr.bf16.mxu0 0
  %1489 = vmatpush2.bf16.msra.mxu0 0
  %1490 = vmatprep.subr.bf16.mxu0 0
  %1491 = vmatpush2.bf16.msra.mxu0 0
  %1492 = vmatprep.mubr.bf16.mxu0 0
  %1493 = vmatmul.mubr.bf16.gmra.mxu0 %v1430
  %v1494 = vpop.f32.mrf.mxu0
  %v1495 = vadd.f32 %v1361, %v1494
  %v1496 = vpop.f32.mrf.mxu0
  %v1497 = vpop.f32.mrf.mxu0
  %v1498 = vadd.f32 %v1364, %v1497
  %v1499 = vpop.f32.mrf.mxu0
  %1500 = vmatprep.mubr.bf16.mxu0 0
  %1501 = vmatmul.mubr.bf16.gmra.mxu0 %v1433
  %v1502 = vpop.f32.mrf.mxu0
  %v1503 = vadd.f32 %v1369, %v1502
  %v1504 = vpop.f32.mrf.mxu0
  %v1505 = vpop.f32.mrf.mxu0
  %v1506 = vadd.f32 %v1372, %v1505
  %v1507 = vpop.f32.mrf.mxu0
  %1508 = vmatprep.mubr.bf16.mxu0 0
  %1509 = vmatmul.mubr.bf16.gmra.mxu0 %v1436
  %v1510 = vpop.f32.mrf.mxu0
  %v1511 = vadd.f32 %v1377, %v1510
  %v1512 = vpop.f32.mrf.mxu0
  %v1513 = vpop.f32.mrf.mxu0
  %v1514 = vadd.f32 %v1380, %v1513
  %v1515 = vpop.f32.mrf.mxu0
  %1516 = vmatprep.mubr.bf16.mxu0 0
  %1517 = vmatmul.mubr.bf16.gmra.mxu0 %v1439
  %v1518 = vpop.f32.mrf.mxu0
  %v1519 = vadd.f32 %v1385, %v1518
  %v1520 = vpop.f32.mrf.mxu0
  %v1521 = vpop.f32.mrf.mxu0
  %v1522 = vadd.f32 %v1388, %v1521
  %v1523 = vpop.f32.mrf.mxu0
  %1524 = vmatprep.mubr.bf16.mxu0 0
  %1525 = vmatmul.mubr.bf16.gmra.mxu0 %v1442
  %v1526 = vpop.f32.mrf.mxu0
  %v1527 = vadd.f32 %v1393, %v1526
  %v1528 = vpop.f32.mrf.mxu0
  %v1529 = vpop.f32.mrf.mxu0
  %v1530 = vadd.f32 %v1396, %v1529
  %v1531 = vpop.f32.mrf.mxu0
  %1532 = vmatprep.mubr.bf16.mxu0 0
  %1533 = vmatmul.mubr.bf16.gmra.mxu0 %v1445
  %v1534 = vpop.f32.mrf.mxu0
  %v1535 = vadd.f32 %v1401, %v1534
  %v1536 = vpop.f32.mrf.mxu0
  %v1537 = vpop.f32.mrf.mxu0
  %v1538 = vadd.f32 %v1404, %v1537
  %v1539 = vpop.f32.mrf.mxu0
  %1540 = vmatprep.mubr.bf16.mxu0 0
  %1541 = vmatmul.mubr.bf16.gmra.mxu0 %v1448
  %v1542 = vpop.f32.mrf.mxu0
  %v1543 = vadd.f32 %v1409, %v1542
  %v1544 = vpop.f32.mrf.mxu0
  %v1545 = vpop.f32.mrf.mxu0
  %v1546 = vadd.f32 %v1412, %v1545
  %v1547 = vpop.f32.mrf.mxu0
  %1548 = vmatprep.mubr.bf16.mxu0 0
  %1549 = vmatmul.mubr.bf16.gmra.mxu0 %v1451
  %v1550 = vpop.f32.mrf.mxu0
  %v1551 = vadd.f32 %v1417, %v1550
  %v1552 = vpop.f32.mrf.mxu0
  %v1553 = vpop.f32.mrf.mxu0
  %v1554 = vadd.f32 %v1420, %v1553
  %v1555 = vpop.f32.mrf.mxu0
  %1556 = vdwg.mxu0
  %v1557 = vld [vmem:[%s1 + $0x200] sm:$0x1]
  %v1558 = vunpack.c.l.bf16 %v1557
  %v1559 = vlaneseq
  %v1560 = vshrl.u32 %v1559, 7
  %v1561 = vsub.s32 0, %v1560
  %v1562 = vrot.slane %v1558, %v1561
  %v1563 = vadd.f32 %v1495, %v1562
  %v1564 = vadd.f32 %v1498, %v1562
  %v1565 = vadd.f32 %v1503, %v1562
  %v1566 = vadd.f32 %v1506, %v1562
  %v1567 = vadd.f32 %v1511, %v1562
  %v1568 = vadd.f32 %v1514, %v1562
  %v1569 = vadd.f32 %v1519, %v1562
  %v1570 = vadd.f32 %v1522, %v1562
  %v1571 = vadd.f32 %v1527, %v1562
  %v1572 = vadd.f32 %v1530, %v1562
  %v1573 = vadd.f32 %v1535, %v1562
  %v1574 = vadd.f32 %v1538, %v1562
  %v1575 = vadd.f32 %v1543, %v1562
  %v1576 = vadd.f32 %v1546, %v1562
  %v1577 = vadd.f32 %v1551, %v1562
  %v1578 = vadd.f32 %v1554, %v1562
  %v1579 = vmax.f32 %v1563, 0.0
  %v1580 = vmax.f32 %v1564, 0.0
  %v1581 = vmax.f32 %v1565, 0.0
  %v1582 = vmax.f32 %v1566, 0.0
  %v1583 = vmax.f32 %v1567, 0.0
  %v1584 = vmax.f32 %v1568, 0.0
  %v1585 = vmax.f32 %v1569, 0.0
  %v1586 = vmax.f32 %v1570, 0.0
  %v1587 = vmax.f32 %v1571, 0.0
  %v1588 = vmax.f32 %v1572, 0.0
  %v1589 = vmax.f32 %v1573, 0.0
  %v1590 = vmax.f32 %v1574, 0.0
  %v1591 = vmax.f32 %v1575, 0.0
  %v1592 = vmax.f32 %v1576, 0.0
  %v1593 = vmax.f32 %v1577, 0.0
  %v1594 = vmax.f32 %v1578, 0.0
  %v1595 = vpack.c.bf16 %v1580, %v1579
  %v1596 = vpack.c.bf16 %v1582, %v1581
  %v1597 = vpack.c.bf16 %v1584, %v1583
  %v1598 = vpack.c.bf16 %v1586, %v1585
  %v1599 = vpack.c.bf16 %v1588, %v1587
  %v1600 = vpack.c.bf16 %v1590, %v1589
  %v1601 = vpack.c.bf16 %v1592, %v1591
  %v1602 = vpack.c.bf16 %v1594, %v1593
  %v1603 = vld [vmem:[%s1 + $0x210] sm:$0xf]
  %v1604 = vld [vmem:[%s1 + $0x218] sm:$0xf]
  %v1605 = vld [vmem:[%s1 + $0x220] sm:$0xf]
  %v1606 = vld [vmem:[%s1 + $0x228] sm:$0xf]
  %v1607 = vld [vmem:[%s1 + $0x230] sm:$0xf]
  %v1608 = vld [vmem:[%s1 + $0x238] sm:$0xf]
  %v1609 = vld [vmem:[%s1 + $0x240] sm:$0xf]
  %v1610 = vld [vmem:[%s1 + $0x248] sm:$0xf]
  %v1611 = vld [vmem:[%s1 + $0x250] sm:$0xf]
  %v1612 = vld [vmem:[%s1 + $0x258] sm:$0xf]
  %v1613 = vld [vmem:[%s1 + $0x260] sm:$0xf]
  %v1614 = vld [vmem:[%s1 + $0x268] sm:$0xf]
  %v1615 = vld [vmem:[%s1 + $0x270] sm:$0xf]
  %v1616 = vld [vmem:[%s1 + $0x278] sm:$0xf]
  %v1617 = vld [vmem:[%s1 + $0x280] sm:$0xf]
  %v1618 = vld [vmem:[%s1 + $0x288] sm:$0xf]
  %v1619 = vld [vmem:[%s1 + $0x290] sm:$0x1]
  %v1620 = vunpack.c.l.bf16 %v1619
  %v1621 = vlaneseq
  %v1622 = vshrl.u32 %v1621, 7
  %v1623 = vsub.s32 0, %v1622
  %v1624 = vrot.slane %v1620, %v1623
  %v1641 = vunpack.c.l.b16 %v1603
  %v1642 = vunpack.c.l.b16 %v1604
  %v1643 = vunpack.c.l.b16 %v1605
  %v1644 = vunpack.c.l.b16 %v1606
  %v1645 = vunpack.c.l.b16 %v1607
  %v1646 = vunpack.c.l.b16 %v1608
  %v1647 = vunpack.c.l.b16 %v1609
  %v1648 = vunpack.c.l.b16 %v1610
  %v1649 = vunpack.c.l.b16 %v1611
  %v1650 = vunpack.c.l.b16 %v1612
  %v1651 = vunpack.c.l.b16 %v1613
  %v1652 = vunpack.c.l.b16 %v1614
  %v1653 = vunpack.c.l.b16 %v1615
  %v1654 = vunpack.c.l.b16 %v1616
  %v1655 = vunpack.c.l.b16 %v1617
  %v1656 = vunpack.c.l.b16 %v1618
  %v1657 = vpack.c.b16 %v1642, %v1641
  %v1658 = vpack.c.b16 %v1644, %v1643
  %v1659 = vpack.c.b16 %v1646, %v1645
  %v1660 = vpack.c.b16 %v1648, %v1647
  %v1661 = vpack.c.b16 %v1650, %v1649
  %v1662 = vpack.c.b16 %v1652, %v1651
  %v1663 = vpack.c.b16 %v1654, %v1653
  %v1664 = vpack.c.b16 %v1656, %v1655
  %1673 = vmatprep.subr.bf16.mxu0 0
  %1674 = vmatpush1.bf16.msra.mxu0 %v1664
  %1675 = vmatprep.subr.bf16.mxu0 0
  %1676 = vmatpush1.bf16.msra.mxu0 %v1663
  %1677 = vmatprep.subr.bf16.mxu0 0
  %1678 = vmatpush1.bf16.msra.mxu0 %v1662
  %1679 = vmatprep.subr.bf16.mxu0 0
  %1680 = vmatpush1.bf16.msra.mxu0 %v1661
  %1681 = vmatprep.subr.bf16.mxu0 0
  %1682 = vmatpush1.bf16.msra.mxu0 %v1660
  %1683 = vmatprep.subr.bf16.mxu0 0
  %1684 = vmatpush1.bf16.msra.mxu0 %v1659
  %1685 = vmatprep.subr.bf16.mxu0 0
  %1686 = vmatpush1.bf16.msra.mxu0 %v1658
  %1687 = vmatprep.subr.bf16.mxu0 0
  %1688 = vmatpush1.bf16.msra.mxu0 %v1657
  %1689 = vmatprep.subr.bf16.mxu0 0
  %1690 = vmatpush2.bf16.msra.mxu0 0
  %1691 = vmatprep.subr.bf16.mxu0 0
  %1692 = vmatpush2.bf16.msra.mxu0 0
  %1693 = vmatprep.subr.bf16.mxu0 0
  %1694 = vmatpush2.bf16.msra.mxu0 0
  %1695 = vmatprep.subr.bf16.mxu0 0
  %1696 = vmatpush2.bf16.msra.mxu0 0
  %1697 = vmatprep.subr.bf16.mxu0 0
  %1698 = vmatpush2.bf16.msra.mxu0 0
  %1699 = vmatprep.subr.bf16.mxu0 0
  %1700 = vmatpush2.bf16.msra.mxu0 0
  %1701 = vmatprep.subr.bf16.mxu0 0
  %1702 = vmatpush2.bf16.msra.mxu0 0
  %1703 = vmatprep.subr.bf16.mxu0 0
  %1704 = vmatpush2.bf16.msra.mxu0 0
  %1705 = vmatprep.mubr.bf16.mxu0 0
  %1706 = vmatmul.mubr.bf16.gmra.mxu0 %v1595
  %v1707 = vpop.f32.mrf.mxu0
  %v1708 = vadd.f32 %v1624, %v1707
  %v1709 = vpop.f32.mrf.mxu0
  %v1710 = vpop.f32.mrf.mxu0
  %v1711 = vadd.f32 %v1624, %v1710
  %v1712 = vpop.f32.mrf.mxu0
  %1713 = vmatprep.mubr.bf16.mxu0 0
  %1714 = vmatmul.mubr.bf16.gmra.mxu0 %v1596
  %v1715 = vpop.f32.mrf.mxu0
  %v1716 = vadd.f32 %v1624, %v1715
  %v1717 = vpop.f32.mrf.mxu0
  %v1718 = vpop.f32.mrf.mxu0
  %v1719 = vadd.f32 %v1624, %v1718
  %v1720 = vpop.f32.mrf.mxu0
  %1721 = vmatprep.mubr.bf16.mxu0 0
  %1722 = vmatmul.mubr.bf16.gmra.mxu0 %v1597
  %v1723 = vpop.f32.mrf.mxu0
  %v1724 = vadd.f32 %v1624, %v1723
  %v1725 = vpop.f32.mrf.mxu0
  %v1726 = vpop.f32.mrf.mxu0
  %v1727 = vadd.f32 %v1624, %v1726
  %v1728 = vpop.f32.mrf.mxu0
  %1729 = vmatprep.mubr.bf16.mxu0 0
  %1730 = vmatmul.mubr.bf16.gmra.mxu0 %v1598
  %v1731 = vpop.f32.mrf.mxu0
  %v1732 = vadd.f32 %v1624, %v1731
  %v1733 = vpop.f32.mrf.mxu0
  %v1734 = vpop.f32.mrf.mxu0
  %v1735 = vadd.f32 %v1624, %v1734
  %v1736 = vpop.f32.mrf.mxu0
  %1737 = vmatprep.mubr.bf16.mxu0 0
  %1738 = vmatmul.mubr.bf16.gmra.mxu0 %v1599
  %v1739 = vpop.f32.mrf.mxu0
  %v1740 = vadd.f32 %v1624, %v1739
  %v1741 = vpop.f32.mrf.mxu0
  %v1742 = vpop.f32.mrf.mxu0
  %v1743 = vadd.f32 %v1624, %v1742
  %v1744 = vpop.f32.mrf.mxu0
  %1745 = vmatprep.mubr.bf16.mxu0 0
  %1746 = vmatmul.mubr.bf16.gmra.mxu0 %v1600
  %v1747 = vpop.f32.mrf.mxu0
  %v1748 = vadd.f32 %v1624, %v1747
  %v1749 = vpop.f32.mrf.mxu0
  %v1750 = vpop.f32.mrf.mxu0
  %v1751 = vadd.f32 %v1624, %v1750
  %v1752 = vpop.f32.mrf.mxu0
  %1753 = vmatprep.mubr.bf16.mxu0 0
  %1754 = vmatmul.mubr.bf16.gmra.mxu0 %v1601
  %v1755 = vpop.f32.mrf.mxu0
  %v1756 = vadd.f32 %v1624, %v1755
  %v1757 = vpop.f32.mrf.mxu0
  %v1758 = vpop.f32.mrf.mxu0
  %v1759 = vadd.f32 %v1624, %v1758
  %v1760 = vpop.f32.mrf.mxu0
  %1761 = vmatprep.mubr.bf16.mxu0 0
  %1762 = vmatmul.mubr.bf16.gmra.mxu0 %v1602
  %v1763 = vpop.f32.mrf.mxu0
  %v1764 = vadd.f32 %v1624, %v1763
  %v1765 = vpop.f32.mrf.mxu0
  %v1766 = vpop.f32.mrf.mxu0
  %v1767 = vadd.f32 %v1624, %v1766
  %v1768 = vpop.f32.mrf.mxu0
  %1769 = vdwg.mxu0
  %1770 = vst [vmem:[%s2] sm:$0xff] %v1708
  %1771 = vst [vmem:[%s2 + $0x8] sm:$0xff] %v1711
  %1772 = vst [vmem:[%s2 + $0x10] sm:$0xff] %v1716
  %1773 = vst [vmem:[%s2 + $0x18] sm:$0xff] %v1719
  %1774 = vst [vmem:[%s2 + $0x20] sm:$0xff] %v1724
  %1775 = vst [vmem:[%s2 + $0x28] sm:$0xff] %v1727
  %1776 = vst [vmem:[%s2 + $0x30] sm:$0xff] %v1732
  %1777 = vst [vmem:[%s2 + $0x38] sm:$0xff] %v1735
  %1778 = vst [vmem:[%s2 + $0x40] sm:$0xff] %v1740
  %1779 = vst [vmem:[%s2 + $0x48] sm:$0xff] %v1743
  %1780 = vst [vmem:[%s2 + $0x50] sm:$0xff] %v1748
  %1781 = vst [vmem:[%s2 + $0x58] sm:$0xff] %v1751
  %1782 = vst [vmem:[%s2 + $0x60] sm:$0xff] %v1756
  %1783 = vst [vmem:[%s2 + $0x68] sm:$0xff] %v1759
  %1784 = vst [vmem:[%s2 + $0x70] sm:$0xff] %v1764
  %1785 = vst [vmem:[%s2 + $0x78] sm:$0xff] %v1767
  // Predicated region
  $region10: #{_lambda_.3} parent=0 // pred_check
    _
  $region11: #{_lambda_.3} parent=0 // pred_check_branch
    %1787 = sbr.rel (0) target = $region13
  $region12: #{_lambda_.3} parent=0 // pred_region
    _
  $region13: #{_lambda_.3} parent=0 // pred_fallthru
    _
  // Predicated region
  $region14: #{_lambda_.3} parent=0 // pred_check
    _
  $region15: #{_lambda_.3} parent=0 // pred_check_branch
    %1789 = sbr.rel (0) target = $region17
  $region16: #{_lambda_.3} parent=0 // pred_region
    _
  $region17: #{_lambda_.3} parent=0 // pred_fallthru
    _

</llo_original>
